<compile_context>
chip_gen: v7x
topology: tpu7x:2x2x1
jax: 0.10.0
libtpu: 0.0.40
codegen_flags: <defaults>
</compile_context>

<pallas_src>
import functools

import jax
import jax.numpy as jnp
from jax.experimental import pallas as pl
from jax.experimental.pallas import tpu as pltpu


def _round_up(x, m):
    return ((x + m - 1) // m) * m


def _erf_fast(x):
    """A&S 7.1.26 erf approximation (|abs err| ~1.5e-7), kernel-side.

    The 1/(1+p|x|) divide is replaced by the EUP approximate reciprocal plus
    two Newton steps (cheaper than a full f32 divide); exp also rides the EUP,
    keeping VPU pressure low on the gelu path.
    """
    a1, a2, a3, a4, a5 = (0.254829592, -0.284496736, 1.421413741,
                          -1.453152027, 1.061405429)
    p = 0.3275911
    sign = jnp.where(x >= 0, 1.0, -1.0)
    ax = jnp.abs(x)
    d = 1.0 + p * ax
    r = pl.reciprocal(d, approx=True)
    r = r * (2.0 - d * r)            # Newton step 1
    r = r * (2.0 - d * r)            # Newton step 2 -> full f32 accuracy
    t = r
    poly = ((((a5 * t + a4) * t + a3) * t + a2) * t + a1) * t
    return sign * (1.0 - poly * jnp.exp(-ax * ax))


def _apply_activation(h, activation, *, erf_fn):
    if activation == "relu":
        return jnp.maximum(h, 0.0)
    elif activation == "gelu":
        # Exact (erf-based) GELU, matching torch.nn.functional.gelu's default.
        return 0.5 * h * (1.0 + erf_fn(h * 0.7071067811865476))
    else:
        raise RuntimeError("Unsupported activation function: {}".format(activation))


def _vmem_limit_bytes():
    try:
        cap = int(pltpu.get_tpu_info().vmem_capacity_bytes)
    except Exception:
        cap = 64 << 20
    # Half of physical VMEM, capped at 64 MiB: 64 MiB on v5e/v6e (128 MiB
    # physical), 32 MiB on v7x (64 MiB physical per TC).
    return int(min(cap // 2, 64 << 20))


# --------------------------------------------------------------------------- #
# Kernel
# --------------------------------------------------------------------------- #
def ff_head_kernel(x_ref, w1_ref, b1_ref, gamma_ref, beta_ref, w2_ref, b2_ref,
                   avg_ref, o_ref, ln_ref, *, activation, eps, groups, hidden):
    """One grid step: (tm, groups*hidden) packed rows -> (tm, lane_out) packed outputs."""
    w1 = w1_ref[...]
    b1 = b1_ref[...]
    gamma = gamma_ref[...]
    beta = beta_ref[...]
    avg = avg_ref[...]

    for g in range(groups):  # small static unroll (groups <= a few)
        # Lane-aligned static slice of the packed input (no relayout: 128-multiples).
        xg = x_ref[:, g * hidden:(g + 1) * hidden]                     # (tm, hidden)
        # ff_linear with block-diagonal W1 (MXU, f32 accumulate).
        h = jnp.dot(xg, w1, preferred_element_type=jnp.float32) + b1
        h = _apply_activation(h, activation, erf_fn=_erf_fast)
        # Per-segment LayerNorm: mean/var via block-diagonal averaging matmul
        # (MXU has plenty of slack; keeps VPU/XLU free).
        mean = jnp.dot(h, avg, preferred_element_type=jnp.float32)
        centered = h - mean
        var = jnp.dot(centered * centered, avg, preferred_element_type=jnp.float32)
        ln = centered * jax.lax.rsqrt(var + eps) * gamma + beta
        # Stash this group's LN output at its lane-aligned slot; the output
        # projection is done once, fused across groups, below.
        ln_ref[:, g * hidden:(g + 1) * hidden] = ln

    # Single fused output projection: (tm, lane_in) x (lane_in, lane_out).
    o_ref[...] = (jnp.dot(ln_ref[...], w2_ref[...],
                          preferred_element_type=jnp.float32)
                  + b2_ref[...]).astype(o_ref.dtype)


# --------------------------------------------------------------------------- #
# Parameter packing (hoist: call once per parameter set)
# --------------------------------------------------------------------------- #
def pack_ff_head_params(params, dtype=jnp.float32):
    """Build the lane-packed block-diagonal parameter set used by the kernel."""
    w1, b1, gamma, beta, w2, b2 = (
        params["w1"], params["b1"], params["gamma"], params["beta"],
        params["w2"], params["b2"],
    )
    dim = int(w1.shape[0])
    out_dim = int(w2.shape[1])

    # Lane-packing factors (fall back to 1 if dims don't divide 128).
    pack = 128 // dim if 128 % dim == 0 else 1        # logical rows per hidden group
    hidden = pack * dim                               # lanes of one hidden group (128 here)
    groups = 128 // (pack * out_dim) if 128 % (pack * out_dim) == 0 else 1
    rows_per_packed = pack * groups                   # logical rows per packed row (16 here)
    lane_in = groups * hidden                         # packed input lane width (512 here)
    lane_out = groups * pack * out_dim                # packed output lane width (128 here)

    eye_p = jnp.eye(pack, dtype=dtype)
    w1p = jnp.kron(eye_p, w1.astype(dtype))                                # (hidden, hidden)
    avgp = jnp.kron(eye_p, jnp.full((dim, dim), 1.0 / dim, dtype))         # (hidden, hidden)
    b1p = jnp.tile(b1.reshape(1, -1).astype(dtype), (1, pack))             # (1, hidden)
    gammap = jnp.tile(gamma.reshape(1, -1).astype(dtype), (1, pack))       # (1, hidden)
    betap = jnp.tile(beta.reshape(1, -1).astype(dtype), (1, pack))         # (1, hidden)
    # Fused W2: group g's block-diagonal (hidden, pack*out_dim) block sits at
    # rows [g*hidden, (g+1)*hidden), cols [g*pack*out_dim, (g+1)*pack*out_dim).
    w2_bd = jnp.kron(eye_p, w2.astype(dtype))                              # (hidden, pack*out_dim)
    w2p = jnp.zeros((lane_in, lane_out), dtype)
    for g in range(groups):
        w2p = w2p.at[g * hidden:(g + 1) * hidden,
                     g * pack * out_dim:(g + 1) * pack * out_dim].set(w2_bd)
    b2p = jnp.tile(b2.reshape(1, -1).astype(dtype), (1, rows_per_packed))  # (1, lane_out)

    # TODO(synk): optional bf16 cast of w1p/w2p (v5e MXU relief) skipped — LN
    # statistics in bf16 do not meet the 2e-5 tolerance at these sizes.
    return {
        "w1p": w1p, "b1p": b1p, "gammap": gammap, "betap": betap,
        "w2p": w2p, "b2p": b2p, "avgp": avgp,
        "dim": dim, "out_dim": out_dim, "pack": pack, "groups": groups,
        "hidden": hidden, "lane_in": lane_in, "lane_out": lane_out,
        "rows_per_packed": rows_per_packed,
    }


# --------------------------------------------------------------------------- #
# Wrapper
# --------------------------------------------------------------------------- #
def ff_head_pallas(x, params, *, activation="relu", tm_p=2048, eps=1e-5):
    """x: [..., dim] float32. Returns [..., out_dim].

    `params` may be the raw parameter dict or the result of
    pack_ff_head_params (preferred: pack once, reuse across calls).
    `tm_p` = packed rows per grid step (each packed row = rows_per_packed
    logical rows; default 2048 packed rows ~= 32768 logical rows, ~5 MiB/step).
    """
    packed = params if "w1p" in params else pack_ff_head_params(params, x.dtype)

    dim = packed["dim"]
    out_dim = packed["out_dim"]
    hidden = packed["hidden"]
    groups = packed["groups"]
    lane_in = packed["lane_in"]
    lane_out = packed["lane_out"]
    rpp = packed["rows_per_packed"]
    dtype = x.dtype

    lead_shape = x.shape[:-1]
    x2d = x.reshape(-1, dim)
    n = x2d.shape[0]

    # Only pad when N isn't a multiple of the lane-packing factor (<= rpp-1
    # rows); tile-boundary raggedness is handled by the cdiv grid with Pallas
    # boundary-block clipping (no full-array copy).
    # TODO(synk): the remaining ragged-N pad is still a full-array copy; a
    # masked tail kernel could remove it entirely.
    n_pad = _round_up(max(n, 1), rpp)
    if n_pad != n:
        x2d = jnp.pad(x2d, ((0, n_pad - n), (0, 0)))
    m = n_pad // rpp                                   # packed rows
    xp = x2d.reshape(m, lane_in)                       # free contiguous reshape

    # Tile selection: multiple of 8, capped so the grid keeps >=4 steps when
    # there is enough work (v7x has 2 TensorCores sharing the 1-D grid).
    tm_desired = max(8, (int(tm_p) // 8) * 8)
    tm_eff = min(tm_desired, _round_up(pl.cdiv(m, 4), 8))
    tm_eff = max(8, tm_eff)
    grid_m = pl.cdiv(m, tm_eff)

    kernel = functools.partial(ff_head_kernel, activation=activation, eps=eps,
                               groups=groups, hidden=hidden)

    outp = pl.pallas_call(
        kernel,
        out_shape=jax.ShapeDtypeStruct((m, lane_out), dtype),
        grid_spec=pltpu.PrefetchScalarGridSpec(
            num_scalar_prefetch=0,
            grid=(grid_m,),
            in_specs=[
                pl.BlockSpec((tm_eff, lane_in), lambda i: (i, 0)),        # packed x rows
                pl.BlockSpec((hidden, hidden), lambda i: (0, 0)),         # W1 (block-diag)
                pl.BlockSpec((1, hidden), lambda i: (0, 0)),              # b1
                pl.BlockSpec((1, hidden), lambda i: (0, 0)),              # gamma
                pl.BlockSpec((1, hidden), lambda i: (0, 0)),              # beta
                pl.BlockSpec((lane_in, lane_out), lambda i: (0, 0)),      # W2 (fused, lane-shifted)
                pl.BlockSpec((1, lane_out), lambda i: (0, 0)),            # b2
                pl.BlockSpec((hidden, hidden), lambda i: (0, 0)),         # averaging matrix
            ],
            out_specs=pl.BlockSpec((tm_eff, lane_out), lambda i: (i, 0)),
            scratch_shapes=[pltpu.VMEM((tm_eff, lane_in), jnp.float32)],  # LN staging
        ),
        compiler_params=pltpu.CompilerParams(
            dimension_semantics=("parallel",),
            vmem_limit_bytes=_vmem_limit_bytes()),
    )(xp, packed["w1p"], packed["b1p"], packed["gammap"], packed["betap"],
      packed["w2p"], packed["b2p"], packed["avgp"])

    out2d = outp.reshape(m * rpp, out_dim)[:n]
    return out2d.reshape(*lead_shape, out_dim)


# --------------------------------------------------------------------------- #
# Pure-JAX reference & synthetic params
# --------------------------------------------------------------------------- #
def ff_head_reference(x, params, *, activation="relu", eps=1e-5):
    """Pure-JAX reference matching the PyTorch module semantics."""
    h = x @ params["w1"] + params["b1"][0]
    h = _apply_activation(h, activation, erf_fn=jax.scipy.special.erf)
    mean = jnp.mean(h, axis=-1, keepdims=True)
    var = jnp.mean((h - mean) ** 2, axis=-1, keepdims=True)
    ln = (h - mean) / jnp.sqrt(var + eps)
    ln = ln * params["gamma"][0] + params["beta"][0]
    return ln @ params["w2"] + params["b2"][0]


def init_params(key, dim, out_dim):
    """Deterministic synthetic init (PyTorch-style uniform(+-1/sqrt(fan_in)))."""
    k1, k2, k3, k4 = jax.random.split(key, 4)
    bound = 1.0 / jnp.sqrt(dim)
    return {
        "w1": jax.random.uniform(k1, (dim, dim), jnp.float32, -bound, bound),
        "b1": jax.random.uniform(k2, (1, dim), jnp.float32, -bound, bound),
        "gamma": jnp.ones((1, dim), jnp.float32),
        "beta": jnp.zeros((1, dim), jnp.float32),
        "w2": jax.random.uniform(k3, (dim, out_dim), jnp.float32, -bound, bound),
        "b2": jax.random.uniform(k4, (1, out_dim), jnp.float32, -bound, bound),
    }


if __name__ == "__main__":
    B, S, DIM, OUT_DIM = 2, 8, 32, 8

    key = jax.random.PRNGKey(0)
    kx, kp = jax.random.split(key)
    x = jax.random.normal(kx, (B, S, DIM), jnp.float32)
    params = init_params(kp, DIM, OUT_DIM)
    packed = pack_ff_head_params(params, jnp.float32)   # hoisted: pack once, reuse

    for act in ("relu", "gelu"):
        out = ff_head_pallas(x, packed, activation=act)
        out = jax.block_until_ready(out)
        ref = ff_head_reference(x, params, activation=act)
        assert out.shape == (B, S, OUT_DIM)
        assert jnp.allclose(out, ref, atol=2e-5, rtol=2e-5), f"mismatch vs reference ({act})"

    print("KERNEL_OK")
</pallas_src>

<mosaic_0001>
module attributes {stable_mosaic.version = 11 : i64} {
  func.func @ff_head_kernel(%arg0: i32, %arg1: memref<8x512xf32, #tpu.memory_space<vmem>>, %arg2: memref<128x128xf32, #tpu.memory_space<vmem>>, %arg3: memref<1x128xf32, #tpu.memory_space<vmem>>, %arg4: memref<1x128xf32, #tpu.memory_space<vmem>>, %arg5: memref<1x128xf32, #tpu.memory_space<vmem>>, %arg6: memref<512x128xf32, #tpu.memory_space<vmem>>, %arg7: memref<1x128xf32, #tpu.memory_space<vmem>>, %arg8: memref<128x128xf32, #tpu.memory_space<vmem>>, %arg9: memref<8x128xf32, #tpu.memory_space<vmem>>, %arg10: memref<8x512xf32, #tpu.memory_space<vmem>>) attributes {dimension_semantics = [#tpu.dimension_semantics<parallel>], iteration_bounds = array<i64: 1>, scalar_prefetch = 0 : i64, scratch_operands = 1 : i64, tpu.core_type = #tpu.core_type<tc>, window_params = [{transform_indices = @transform_0, window_bounds = array<i64: 8, 512>}, {pipeline_mode = #tpu.pipeline_mode<synchronous>, transform_indices = @transform_1, window_bounds = array<i64: 128, 128>}, {pipeline_mode = #tpu.pipeline_mode<synchronous>, transform_indices = @transform_2, window_bounds = array<i64: 1, 128>}, {pipeline_mode = #tpu.pipeline_mode<synchronous>, transform_indices = @transform_3, window_bounds = array<i64: 1, 128>}, {pipeline_mode = #tpu.pipeline_mode<synchronous>, transform_indices = @transform_4, window_bounds = array<i64: 1, 128>}, {pipeline_mode = #tpu.pipeline_mode<synchronous>, transform_indices = @transform_5, window_bounds = array<i64: 512, 128>}, {pipeline_mode = #tpu.pipeline_mode<synchronous>, transform_indices = @transform_6, window_bounds = array<i64: 1, 128>}, {pipeline_mode = #tpu.pipeline_mode<synchronous>, transform_indices = @transform_7, window_bounds = array<i64: 128, 128>}, {transform_indices = @transform_8, window_bounds = array<i64: 8, 128>}]} {
    %c0 = arith.constant 0 : index
    %c0_0 = arith.constant 0 : index
    %0 = vector.load %arg2[%c0, %c0_0] : memref<128x128xf32, #tpu.memory_space<vmem>>, vector<128x128xf32>
    %c0_1 = arith.constant 0 : index
    %c0_2 = arith.constant 0 : index
    %1 = vector.load %arg3[%c0_1, %c0_2] : memref<1x128xf32, #tpu.memory_space<vmem>>, vector<1x128xf32>
    %c0_3 = arith.constant 0 : index
    %c0_4 = arith.constant 0 : index
    %2 = vector.load %arg4[%c0_3, %c0_4] : memref<1x128xf32, #tpu.memory_space<vmem>>, vector<1x128xf32>
    %c0_5 = arith.constant 0 : index
    %c0_6 = arith.constant 0 : index
    %3 = vector.load %arg5[%c0_5, %c0_6] : memref<1x128xf32, #tpu.memory_space<vmem>>, vector<1x128xf32>
    %c0_7 = arith.constant 0 : index
    %c0_8 = arith.constant 0 : index
    %4 = vector.load %arg8[%c0_7, %c0_8] : memref<128x128xf32, #tpu.memory_space<vmem>>, vector<128x128xf32>
    %c0_9 = arith.constant 0 : index
    %c0_10 = arith.constant 0 : index
    %5 = vector.load %arg1[%c0_9, %c0_10] : memref<8x512xf32, #tpu.memory_space<vmem>>, vector<8x128xf32>
    %cst = arith.constant dense<0.000000e+00> : vector<8x128xf32>
    %6 = tpu.matmul %5, %0, %cst {dimension_numbers = #tpu.dot_dimension_numbers<[1], [0], [0], [1], [0, 0, 1, 1], [], []>} : vector<8x128xf32>, vector<128x128xf32>, vector<8x128xf32> -> vector<8x128xf32>
    %7 = vector.broadcast %1 : vector<1x128xf32> to vector<8x128xf32>
    %8 = arith.addf %6, %7 : vector<8x128xf32>
    %cst_11 = arith.constant 0.000000e+00 : f32
    %9 = vector.broadcast %cst_11 : f32 to vector<8x128xf32>
    %10 = arith.maximumf %8, %9 : vector<8x128xf32>
    %cst_12 = arith.constant dense<0.000000e+00> : vector<8x128xf32>
    %11 = tpu.matmul %10, %4, %cst_12 {dimension_numbers = #tpu.dot_dimension_numbers<[1], [0], [0], [1], [0, 0, 1, 1], [], []>} : vector<8x128xf32>, vector<128x128xf32>, vector<8x128xf32> -> vector<8x128xf32>
    %12 = arith.subf %10, %11 : vector<8x128xf32>
    %13 = arith.mulf %12, %12 : vector<8x128xf32>
    %cst_13 = arith.constant dense<0.000000e+00> : vector<8x128xf32>
    %14 = tpu.matmul %13, %4, %cst_13 {dimension_numbers = #tpu.dot_dimension_numbers<[1], [0], [0], [1], [0, 0, 1, 1], [], []>} : vector<8x128xf32>, vector<128x128xf32>, vector<8x128xf32> -> vector<8x128xf32>
    %cst_14 = arith.constant 9.99999974E-6 : f32
    %15 = vector.broadcast %cst_14 : f32 to vector<8x128xf32>
    %16 = arith.addf %14, %15 : vector<8x128xf32>
    %17 = math.rsqrt %16 : vector<8x128xf32>
    %18 = arith.mulf %12, %17 : vector<8x128xf32>
    %19 = vector.broadcast %2 : vector<1x128xf32> to vector<8x128xf32>
    %20 = arith.mulf %18, %19 : vector<8x128xf32>
    %21 = vector.broadcast %3 : vector<1x128xf32> to vector<8x128xf32>
    %22 = arith.addf %20, %21 : vector<8x128xf32>
    %c0_15 = arith.constant 0 : index
    %c0_16 = arith.constant 0 : index
    %23 = vector.load %arg10[%c0_15, %c0_16] : memref<8x512xf32, #tpu.memory_space<vmem>>, vector<8x128xf32>
    tpu.vector_store %arg10[%c0_15, %c0_16], %22 {strides = array<i32>} : memref<8x512xf32, #tpu.memory_space<vmem>>, vector<8x128xf32>,
    %c0_17 = arith.constant 0 : index
    %c128 = arith.constant 128 : index
    %24 = vector.load %arg1[%c0_17, %c128] : memref<8x512xf32, #tpu.memory_space<vmem>>, vector<8x128xf32>
    %cst_18 = arith.constant dense<0.000000e+00> : vector<8x128xf32>
    %25 = tpu.matmul %24, %0, %cst_18 {dimension_numbers = #tpu.dot_dimension_numbers<[1], [0], [0], [1], [0, 0, 1, 1], [], []>} : vector<8x128xf32>, vector<128x128xf32>, vector<8x128xf32> -> vector<8x128xf32>
    %26 = vector.broadcast %1 : vector<1x128xf32> to vector<8x128xf32>
    %27 = arith.addf %25, %26 : vector<8x128xf32>
    %cst_19 = arith.constant 0.000000e+00 : f32
    %28 = vector.broadcast %cst_19 : f32 to vector<8x128xf32>
    %29 = arith.maximumf %27, %28 : vector<8x128xf32>
    %cst_20 = arith.constant dense<0.000000e+00> : vector<8x128xf32>
    %30 = tpu.matmul %29, %4, %cst_20 {dimension_numbers = #tpu.dot_dimension_numbers<[1], [0], [0], [1], [0, 0, 1, 1], [], []>} : vector<8x128xf32>, vector<128x128xf32>, vector<8x128xf32> -> vector<8x128xf32>
    %31 = arith.subf %29, %30 : vector<8x128xf32>
    %32 = arith.mulf %31, %31 : vector<8x128xf32>
    %cst_21 = arith.constant dense<0.000000e+00> : vector<8x128xf32>
    %33 = tpu.matmul %32, %4, %cst_21 {dimension_numbers = #tpu.dot_dimension_numbers<[1], [0], [0], [1], [0, 0, 1, 1], [], []>} : vector<8x128xf32>, vector<128x128xf32>, vector<8x128xf32> -> vector<8x128xf32>
    %cst_22 = arith.constant 9.99999974E-6 : f32
    %34 = vector.broadcast %cst_22 : f32 to vector<8x128xf32>
    %35 = arith.addf %33, %34 : vector<8x128xf32>
    %36 = math.rsqrt %35 : vector<8x128xf32>
    %37 = arith.mulf %31, %36 : vector<8x128xf32>
    %38 = vector.broadcast %2 : vector<1x128xf32> to vector<8x128xf32>
    %39 = arith.mulf %37, %38 : vector<8x128xf32>
    %40 = vector.broadcast %3 : vector<1x128xf32> to vector<8x128xf32>
    %41 = arith.addf %39, %40 : vector<8x128xf32>
    %c0_23 = arith.constant 0 : index
    %c128_24 = arith.constant 128 : index
    %42 = vector.load %arg10[%c0_23, %c128_24] : memref<8x512xf32, #tpu.memory_space<vmem>>, vector<8x128xf32>
    tpu.vector_store %arg10[%c0_23, %c128_24], %41 {strides = array<i32>} : memref<8x512xf32, #tpu.memory_space<vmem>>, vector<8x128xf32>,
    %c0_25 = arith.constant 0 : index
    %c256 = arith.constant 256 : index
    %43 = vector.load %arg1[%c0_25, %c256] : memref<8x512xf32, #tpu.memory_space<vmem>>, vector<8x128xf32>
    %cst_26 = arith.constant dense<0.000000e+00> : vector<8x128xf32>
    %44 = tpu.matmul %43, %0, %cst_26 {dimension_numbers = #tpu.dot_dimension_numbers<[1], [0], [0], [1], [0, 0, 1, 1], [], []>} : vector<8x128xf32>, vector<128x128xf32>, vector<8x128xf32> -> vector<8x128xf32>
    %45 = vector.broadcast %1 : vector<1x128xf32> to vector<8x128xf32>
    %46 = arith.addf %44, %45 : vector<8x128xf32>
    %cst_27 = arith.constant 0.000000e+00 : f32
    %47 = vector.broadcast %cst_27 : f32 to vector<8x128xf32>
    %48 = arith.maximumf %46, %47 : vector<8x128xf32>
    %cst_28 = arith.constant dense<0.000000e+00> : vector<8x128xf32>
    %49 = tpu.matmul %48, %4, %cst_28 {dimension_numbers = #tpu.dot_dimension_numbers<[1], [0], [0], [1], [0, 0, 1, 1], [], []>} : vector<8x128xf32>, vector<128x128xf32>, vector<8x128xf32> -> vector<8x128xf32>
    %50 = arith.subf %48, %49 : vector<8x128xf32>
    %51 = arith.mulf %50, %50 : vector<8x128xf32>
    %cst_29 = arith.constant dense<0.000000e+00> : vector<8x128xf32>
    %52 = tpu.matmul %51, %4, %cst_29 {dimension_numbers = #tpu.dot_dimension_numbers<[1], [0], [0], [1], [0, 0, 1, 1], [], []>} : vector<8x128xf32>, vector<128x128xf32>, vector<8x128xf32> -> vector<8x128xf32>
    %cst_30 = arith.constant 9.99999974E-6 : f32
    %53 = vector.broadcast %cst_30 : f32 to vector<8x128xf32>
    %54 = arith.addf %52, %53 : vector<8x128xf32>
    %55 = math.rsqrt %54 : vector<8x128xf32>
    %56 = arith.mulf %50, %55 : vector<8x128xf32>
    %57 = vector.broadcast %2 : vector<1x128xf32> to vector<8x128xf32>
    %58 = arith.mulf %56, %57 : vector<8x128xf32>
    %59 = vector.broadcast %3 : vector<1x128xf32> to vector<8x128xf32>
    %60 = arith.addf %58, %59 : vector<8x128xf32>
    %c0_31 = arith.constant 0 : index
    %c256_32 = arith.constant 256 : index
    %61 = vector.load %arg10[%c0_31, %c256_32] : memref<8x512xf32, #tpu.memory_space<vmem>>, vector<8x128xf32>
    tpu.vector_store %arg10[%c0_31, %c256_32], %60 {strides = array<i32>} : memref<8x512xf32, #tpu.memory_space<vmem>>, vector<8x128xf32>,
    %c0_33 = arith.constant 0 : index
    %c384 = arith.constant 384 : index
    %62 = vector.load %arg1[%c0_33, %c384] : memref<8x512xf32, #tpu.memory_space<vmem>>, vector<8x128xf32>
    %cst_34 = arith.constant dense<0.000000e+00> : vector<8x128xf32>
    %63 = tpu.matmul %62, %0, %cst_34 {dimension_numbers = #tpu.dot_dimension_numbers<[1], [0], [0], [1], [0, 0, 1, 1], [], []>} : vector<8x128xf32>, vector<128x128xf32>, vector<8x128xf32> -> vector<8x128xf32>
    %64 = vector.broadcast %1 : vector<1x128xf32> to vector<8x128xf32>
    %65 = arith.addf %63, %64 : vector<8x128xf32>
    %cst_35 = arith.constant 0.000000e+00 : f32
    %66 = vector.broadcast %cst_35 : f32 to vector<8x128xf32>
    %67 = arith.maximumf %65, %66 : vector<8x128xf32>
    %cst_36 = arith.constant dense<0.000000e+00> : vector<8x128xf32>
    %68 = tpu.matmul %67, %4, %cst_36 {dimension_numbers = #tpu.dot_dimension_numbers<[1], [0], [0], [1], [0, 0, 1, 1], [], []>} : vector<8x128xf32>, vector<128x128xf32>, vector<8x128xf32> -> vector<8x128xf32>
    %69 = arith.subf %67, %68 : vector<8x128xf32>
    %70 = arith.mulf %69, %69 : vector<8x128xf32>
    %cst_37 = arith.constant dense<0.000000e+00> : vector<8x128xf32>
    %71 = tpu.matmul %70, %4, %cst_37 {dimension_numbers = #tpu.dot_dimension_numbers<[1], [0], [0], [1], [0, 0, 1, 1], [], []>} : vector<8x128xf32>, vector<128x128xf32>, vector<8x128xf32> -> vector<8x128xf32>
    %cst_38 = arith.constant 9.99999974E-6 : f32
    %72 = vector.broadcast %cst_38 : f32 to vector<8x128xf32>
    %73 = arith.addf %71, %72 : vector<8x128xf32>
    %74 = math.rsqrt %73 : vector<8x128xf32>
    %75 = arith.mulf %69, %74 : vector<8x128xf32>
    %76 = vector.broadcast %2 : vector<1x128xf32> to vector<8x128xf32>
    %77 = arith.mulf %75, %76 : vector<8x128xf32>
    %78 = vector.broadcast %3 : vector<1x128xf32> to vector<8x128xf32>
    %79 = arith.addf %77, %78 : vector<8x128xf32>
    %c0_39 = arith.constant 0 : index
    %c384_40 = arith.constant 384 : index
    %80 = vector.load %arg10[%c0_39, %c384_40] : memref<8x512xf32, #tpu.memory_space<vmem>>, vector<8x128xf32>
    tpu.vector_store %arg10[%c0_39, %c384_40], %79 {strides = array<i32>} : memref<8x512xf32, #tpu.memory_space<vmem>>, vector<8x128xf32>,
    %c0_41 = arith.constant 0 : index
    %c0_42 = arith.constant 0 : index
    %81 = vector.load %arg10[%c0_41, %c0_42] : memref<8x512xf32, #tpu.memory_space<vmem>>, vector<8x512xf32>
    %c0_43 = arith.constant 0 : index
    %c0_44 = arith.constant 0 : index
    %82 = vector.load %arg6[%c0_43, %c0_44] : memref<512x128xf32, #tpu.memory_space<vmem>>, vector<512x128xf32>
    %cst_45 = arith.constant dense<0.000000e+00> : vector<8x128xf32>
    %83 = tpu.matmul %81, %82, %cst_45 {dimension_numbers = #tpu.dot_dimension_numbers<[1], [0], [0], [1], [0, 0, 1, 1], [], []>} : vector<8x512xf32>, vector<512x128xf32>, vector<8x128xf32> -> vector<8x128xf32>
    %c0_46 = arith.constant 0 : index
    %c0_47 = arith.constant 0 : index
    %84 = vector.load %arg7[%c0_46, %c0_47] : memref<1x128xf32, #tpu.memory_space<vmem>>, vector<1x128xf32>
    %85 = vector.broadcast %84 : vector<1x128xf32> to vector<8x128xf32>
    %86 = arith.addf %83, %85 : vector<8x128xf32>
    %c0_48 = arith.constant 0 : index
    %c0_49 = arith.constant 0 : index
    %87 = vector.load %arg9[%c0_48, %c0_49] : memref<8x128xf32, #tpu.memory_space<vmem>>, vector<8x128xf32>
    tpu.vector_store %arg9[%c0_48, %c0_49], %86 {strides = array<i32>} : memref<8x128xf32, #tpu.memory_space<vmem>>, vector<8x128xf32>,
    return
  }
  func.func @transform_0(%arg0: i32) -> (i32, i32) {
    %c0_i32 = arith.constant 0 : i32
    %c0_i32_0 = arith.constant 0 : i32
    return %arg0, %c0_i32 : i32, i32
  }
  func.func @transform_1(%arg0: i32) -> (i32, i32) {
    %c0_i32 = arith.constant 0 : i32
    %c0_i32_0 = arith.constant 0 : i32
    %c0_i32_1 = arith.constant 0 : i32
    return %c0_i32, %c0_i32_0 : i32, i32
  }
  func.func @transform_2(%arg0: i32) -> (i32, i32) {
    %c0_i32 = arith.constant 0 : i32
    %c0_i32_0 = arith.constant 0 : i32
    %c0_i32_1 = arith.constant 0 : i32
    return %c0_i32, %c0_i32_0 : i32, i32
  }
  func.func @transform_3(%arg0: i32) -> (i32, i32) {
    %c0_i32 = arith.constant 0 : i32
    %c0_i32_0 = arith.constant 0 : i32
    %c0_i32_1 = arith.constant 0 : i32
    return %c0_i32, %c0_i32_0 : i32, i32
  }
  func.func @transform_4(%arg0: i32) -> (i32, i32) {
    %c0_i32 = arith.constant 0 : i32
    %c0_i32_0 = arith.constant 0 : i32
    %c0_i32_1 = arith.constant 0 : i32
    return %c0_i32, %c0_i32_0 : i32, i32
  }
  func.func @transform_5(%arg0: i32) -> (i32, i32) {
    %c0_i32 = arith.constant 0 : i32
    %c0_i32_0 = arith.constant 0 : i32
    %c0_i32_1 = arith.constant 0 : i32
    return %c0_i32, %c0_i32_0 : i32, i32
  }
  func.func @transform_6(%arg0: i32) -> (i32, i32) {
    %c0_i32 = arith.constant 0 : i32
    %c0_i32_0 = arith.constant 0 : i32
    %c0_i32_1 = arith.constant 0 : i32
    return %c0_i32, %c0_i32_0 : i32, i32
  }
  func.func @transform_7(%arg0: i32) -> (i32, i32) {
    %c0_i32 = arith.constant 0 : i32
    %c0_i32_0 = arith.constant 0 : i32
    %c0_i32_1 = arith.constant 0 : i32
    return %c0_i32, %c0_i32_0 : i32, i32
  }
  func.func @transform_8(%arg0: i32) -> (i32, i32) {
    %c0_i32 = arith.constant 0 : i32
    %c0_i32_0 = arith.constant 0 : i32
    return %arg0, %c0_i32 : i32, i32
  }
}

</mosaic_0001>

<llo_original>
// kernel: tpu_custom_call.1
$region0: #{tpu_custom_call.1}
  #allocation0 [shape = 'u32[]', space=smem, size = 0x4, offset = 0x4, fixed_abs, tag = 'smem constant byte address 0x4 - core index']
  #allocation1 [shape = 'u32[144,128]{1,0:T(1,128)}', space=vmem, size = 0x12000, scoped, tag = 'internal scratch']
  #allocation2 [shape = 'f32[8,512]{1,0:T(8,128)}', space=vmem, size = 0x4000, scoped, tag = 'scratch operand']
  %s0 = inlined_call_operand.hbm [shape: f32[1,512], index: 0, kind: input, shape index: {}]
  %s1 = inlined_call_operand.hbm [shape: f32[128,128], index: 1, kind: input, shape index: {}]
  %s2 = inlined_call_operand.vmem [shape: f32[1,128], index: 2, kind: input, shape index: {}]
  %s3 = inlined_call_operand.vmem [shape: f32[1,128], index: 3, kind: input, shape index: {}]
  %s4 = inlined_call_operand.vmem [shape: f32[1,128], index: 4, kind: input, shape index: {}]
  %s5 = inlined_call_operand.hbm [shape: f32[512,128], index: 5, kind: input, shape index: {}]
  %s6 = inlined_call_operand.vmem [shape: f32[1,128], index: 6, kind: input, shape index: {}]
  %s7 = inlined_call_operand.hbm [shape: f32[128,128], index: 7, kind: input, shape index: {}]
  %s8 = inlined_call_operand.hbm [shape: f32[1,128], index: 8, kind: output, shape index: {}]
  %s9 = sld [smem:[#allocation0]]
  $region58: #{tpu_custom_call.1} parent=0
    _
  %s11 = ssub.s32 1, %s9
  %s12 = scalar_select 0, %s11, %s9
  $region1: #{tpu_custom_call.1} parent=0
    #allocation3 [shape = 'u8[16384]{0}', space=vmem, size = 0x4000, scoped, tag = 'input window, operand 0, single buffered']
    #allocation4 [shape = 's32[1]{0}', space=sflag, size = 0x4, scoped, tag = 'scoped memory for tpu_custom_call.1']
    #allocation5 [shape = 's32[1]{0}', space=sflag, size = 0x4, scoped, tag = 'scoped memory for tpu_custom_call.1']
    #allocation6 [shape = 'u8[65536]{0}', space=vmem, size = 0x10000, scoped, tag = 'input window, operand 1, single buffered']
    #allocation7 [shape = 's32[1]{0}', space=sflag, size = 0x4, scoped, tag = 'scoped memory for tpu_custom_call.1']
    #allocation8 [shape = 'u8[262144]{0}', space=vmem, size = 0x40000, scoped, tag = 'input window, operand 5, single buffered']
    #allocation9 [shape = 'u8[65536]{0}', space=vmem, size = 0x10000, scoped, tag = 'input window, operand 7, single buffered']
    #allocation10 [shape = 's32[1]{0}', space=sflag, size = 0x4, scoped, tag = 'scoped memory for tpu_custom_call.1']
    #allocation11 [shape = 'u8[4096]{0}', space=vmem, size = 0x1000, scoped, tag = 'output window, operand 0, single buffered']
    %13 = vsyncpa [#allocation4], 0
    %14 = vsyncpa [#allocation7], 0
    %15 = vsyncpa [#allocation10], 0
    %16 = vsyncpa [#allocation5], 0
    // Predicated region
    $region2: #{tpu_custom_call.1} parent=1 // pred_check
      _
    $region3: #{tpu_custom_call.1} parent=1 // pred_check_branch
      %18 = sbr.rel (0) target = $region5
    $region4: #{tpu_custom_call.1} parent=1 // pred_region
      %s20 = ssub.s32 512, 64
      %21 = vsyncadd [#allocation4], %s20
      %s22 = sshll.u32 [#allocation3], 4
      %s23 = int_to_ptr.vmem [resolvable:$true] %s22
      %28 = dma.hbm_to_vmem [thread:$0]  %s0, 64, %s23, [#allocation4], 64, 64, 4
    $region5: #{tpu_custom_call.1} parent=1 // pred_fallthru
      _
    // Predicated region
    $region6: #{tpu_custom_call.1} parent=1 // pred_check
      _
    $region7: #{tpu_custom_call.1} parent=1 // pred_check_branch
      %30 = sbr.rel (0) target = $region9
    $region8: #{tpu_custom_call.1} parent=1 // pred_region
      %s32 = ssub.s32 2048, 2048
      %33 = vsyncadd [#allocation7], %s32
      %s34 = sshll.u32 [#allocation6], 4
      %s35 = int_to_ptr.vmem [resolvable:$true] %s34
      %40 = dma.hbm_to_vmem [thread:$0]  %s1, 2048, %s35, [#allocation7], 128, 128, 8
    $region9: #{tpu_custom_call.1} parent=1 // pred_fallthru
      _
    // Predicated region
    $region10: #{tpu_custom_call.1} parent=1 // pred_check
      _
    $region11: #{tpu_custom_call.1} parent=1 // pred_check_branch
      %42 = sbr.rel (0) target = $region13
    $region12: #{tpu_custom_call.1} parent=1 // pred_region
      _
    $region13: #{tpu_custom_call.1} parent=1 // pred_fallthru
      _
    // Predicated region
    $region14: #{tpu_custom_call.1} parent=1 // pred_check
      _
    $region15: #{tpu_custom_call.1} parent=1 // pred_check_branch
      %44 = sbr.rel (0) target = $region17
    $region16: #{tpu_custom_call.1} parent=1 // pred_region
      _
    $region17: #{tpu_custom_call.1} parent=1 // pred_fallthru
      _
    // Predicated region
    $region18: #{tpu_custom_call.1} parent=1 // pred_check
      _
    $region19: #{tpu_custom_call.1} parent=1 // pred_check_branch
      %46 = sbr.rel (0) target = $region21
    $region20: #{tpu_custom_call.1} parent=1 // pred_region
      _
    $region21: #{tpu_custom_call.1} parent=1 // pred_fallthru
      _
    // Predicated region
    $region22: #{tpu_custom_call.1} parent=1 // pred_check
      _
    $region23: #{tpu_custom_call.1} parent=1 // pred_check_branch
      %48 = sbr.rel (0) target = $region25
    $region24: #{tpu_custom_call.1} parent=1 // pred_region
      %s50 = ssub.s32 8192, 8192
      %51 = vsyncadd [#allocation7], %s50
      %s52 = sshll.u32 [#allocation8], 4
      %s53 = int_to_ptr.vmem [resolvable:$true] %s52
      %58 = dma.hbm_to_vmem [thread:$0]  %s5, 8192, %s53, [#allocation7], 128, 128, 8
    $region25: #{tpu_custom_call.1} parent=1 // pred_fallthru
      _
    // Predicated region
    $region26: #{tpu_custom_call.1} parent=1 // pred_check
      _
    $region27: #{tpu_custom_call.1} parent=1 // pred_check_branch
      %60 = sbr.rel (0) target = $region29
    $region28: #{tpu_custom_call.1} parent=1 // pred_region
      _
    $region29: #{tpu_custom_call.1} parent=1 // pred_fallthru
      _
    // Predicated region
    $region30: #{tpu_custom_call.1} parent=1 // pred_check
      _
    $region31: #{tpu_custom_call.1} parent=1 // pred_check_branch
      %62 = sbr.rel (0) target = $region33
    $region32: #{tpu_custom_call.1} parent=1 // pred_region
      %s64 = ssub.s32 2048, 2048
      %65 = vsyncadd [#allocation10], %s64
      %s66 = sshll.u32 [#allocation9], 4
      %s67 = int_to_ptr.vmem [resolvable:$true] %s66
      %72 = dma.hbm_to_vmem [thread:$0]  %s7, 2048, %s67, [#allocation10], 128, 128, 8
    $region33: #{tpu_custom_call.1} parent=1 // pred_fallthru
      _
    // Predicated region
    $region34: #{tpu_custom_call.1} parent=1 // pred_check
      _
    $region35: #{tpu_custom_call.1} parent=1 // pred_check_branch
      %74 = sbr.rel (0) target = $region37
    $region36: #{tpu_custom_call.1} parent=1 // pred_region
      %75 = dma.done [#allocation4], 512
    $region37: #{tpu_custom_call.1} parent=1 // pred_fallthru
      _
    // Predicated region
    $region38: #{tpu_custom_call.1} parent=1 // pred_check
      _
    $region39: #{tpu_custom_call.1} parent=1 // pred_check_branch
      %77 = sbr.rel (0) target = $region41
    $region40: #{tpu_custom_call.1} parent=1 // pred_region
      %78 = dma.done [#allocation7], 2048
    $region41: #{tpu_custom_call.1} parent=1 // pred_fallthru
      _
    // Predicated region
    $region42: #{tpu_custom_call.1} parent=1 // pred_check
      _
    $region43: #{tpu_custom_call.1} parent=1 // pred_check_branch
      %80 = sbr.rel (0) target = $region45
    $region44: #{tpu_custom_call.1} parent=1 // pred_region
      %81 = dma.done [#allocation7], 8192
    $region45: #{tpu_custom_call.1} parent=1 // pred_fallthru
      _
    // Predicated region
    $region46: #{tpu_custom_call.1} parent=1 // pred_check
      _
    $region47: #{tpu_custom_call.1} parent=1 // pred_check_branch
      %83 = sbr.rel (0) target = $region49
    $region48: #{tpu_custom_call.1} parent=1 // pred_region
      %84 = dma.done [#allocation10], 2048
    $region49: #{tpu_custom_call.1} parent=1 // pred_fallthru
      _
    %v85 = vld [vmem:[#allocation6] sm:$0xff]
    %v86 = vld [vmem:[#allocation6 + $0x8] sm:$0xff]
    %v87 = vld [vmem:[#allocation6 + $0x10] sm:$0xff]
    %v88 = vld [vmem:[#allocation6 + $0x18] sm:$0xff]
    %v89 = vld [vmem:[#allocation6 + $0x20] sm:$0xff]
    %v90 = vld [vmem:[#allocation6 + $0x28] sm:$0xff]
    %v91 = vld [vmem:[#allocation6 + $0x30] sm:$0xff]
    %v92 = vld [vmem:[#allocation6 + $0x38] sm:$0xff]
    %v93 = vld [vmem:[#allocation6 + $0x40] sm:$0xff]
    %v94 = vld [vmem:[#allocation6 + $0x48] sm:$0xff]
    %v95 = vld [vmem:[#allocation6 + $0x50] sm:$0xff]
    %v96 = vld [vmem:[#allocation6 + $0x58] sm:$0xff]
    %v97 = vld [vmem:[#allocation6 + $0x60] sm:$0xff]
    %v98 = vld [vmem:[#allocation6 + $0x68] sm:$0xff]
    %v99 = vld [vmem:[#allocation6 + $0x70] sm:$0xff]
    %v100 = vld [vmem:[#allocation6 + $0x78] sm:$0xff]
    %v101 = vld [vmem:[%s2] sm:$0x1]
    %v102 = vld [vmem:[%s3] sm:$0x1]
    %v103 = vld [vmem:[%s4] sm:$0x1]
    %v104 = vld [vmem:[#allocation9] sm:$0xff]
    %v105 = vld [vmem:[#allocation9 + $0x8] sm:$0xff]
    %v106 = vld [vmem:[#allocation9 + $0x10] sm:$0xff]
    %v107 = vld [vmem:[#allocation9 + $0x18] sm:$0xff]
    %v108 = vld [vmem:[#allocation9 + $0x20] sm:$0xff]
    %v109 = vld [vmem:[#allocation9 + $0x28] sm:$0xff]
    %v110 = vld [vmem:[#allocation9 + $0x30] sm:$0xff]
    %v111 = vld [vmem:[#allocation9 + $0x38] sm:$0xff]
    %v112 = vld [vmem:[#allocation9 + $0x40] sm:$0xff]
    %v113 = vld [vmem:[#allocation9 + $0x48] sm:$0xff]
    %v114 = vld [vmem:[#allocation9 + $0x50] sm:$0xff]
    %v115 = vld [vmem:[#allocation9 + $0x58] sm:$0xff]
    %v116 = vld [vmem:[#allocation9 + $0x60] sm:$0xff]
    %v117 = vld [vmem:[#allocation9 + $0x68] sm:$0xff]
    %v118 = vld [vmem:[#allocation9 + $0x70] sm:$0xff]
    %v119 = vld [vmem:[#allocation9 + $0x78] sm:$0xff]
    %v120 = vld [vmem:[#allocation3] sm:$0x1]
    %v121 = vld [vmem:[#allocation3 + $0x4] sm:$0x1]
    %v122 = vld [vmem:[#allocation3 + $0x8] sm:$0x1]
    %v123 = vld [vmem:[#allocation3 + $0xc] sm:$0x1]
    %v124 = vld [vmem:[#allocation3 + $0x10] sm:$0x1]
    %v125 = vld [vmem:[#allocation3 + $0x14] sm:$0x1]
    %v126 = vld [vmem:[#allocation3 + $0x18] sm:$0x1]
    %v127 = vld [vmem:[#allocation3 + $0x1c] sm:$0x1]
    %v129 = vlaneseq
    %v130 = vshrl.u32 %v129, 7
    %v131 = vsub.s32 0, %v130
    %v132 = vrot.slane %v101, %v131
    %v142 = vcombine.low %v120, %v121
    %v143 = vcombine.low %v122, %v123
    %v144 = vcombine.low %v124, %v125
    %v145 = vcombine.low %v126, %v127
    %v147 = vunpack.c.l.s4 1966171168
    %v148 = vunpack.c.0.s8 %v147
    %v149 = vlaneseq
    %v150 = vshrl.u32 %v149, 7
    %v151 = vsub.s32 %v148, %v150
    %v152 = vrot.slane %v142, %v151
    %v154 = vunpack.c.l.s4 1966171168
    %v155 = vunpack.c.0.s8 %v154
    %v156 = vlaneseq
    %v157 = vshrl.u32 %v156, 7
    %v158 = vsub.s32 %v155, %v157
    %v159 = vrot.slane %v143, %v158
    %v161 = vunpack.c.l.s4 1966171168
    %v162 = vunpack.c.0.s8 %v161
    %v163 = vlaneseq
    %v164 = vshrl.u32 %v163, 7
    %v165 = vsub.s32 %v162, %v164
    %v166 = vrot.slane %v144, %v165
    %v168 = vunpack.c.l.s4 1966171168
    %v169 = vunpack.c.0.s8 %v168
    %v170 = vlaneseq
    %v171 = vshrl.u32 %v170, 7
    %v172 = vsub.s32 %v169, %v171
    %v173 = vrot.slane %v145, %v172
    %v174 = vcombine.low %v152, %v159
    %v175 = vcombine.low %v166, %v173
    %v177 = vunpack.c.l.s4 1966171168
    %v178 = vunpack.c.0.s8 %v177
    %v179 = vlaneseq
    %v180 = vshrl.u32 %v179, 7
    %v181 = vsub.s32 %v178, %v180
    %v182 = vrot.slane %v174, %v181
    %v184 = vunpack.c.l.s4 1966171168
    %v185 = vunpack.c.0.s8 %v184
    %v186 = vlaneseq
    %v187 = vshrl.u32 %v186, 7
    %v188 = vsub.s32 %v185, %v187
    %v189 = vrot.slane %v175, %v188
    %v190 = vcombine.low %v182, %v189
    %192 = vmatprep.subr.mxu0 0.0
    %193 = vmatpush1.msra.mxu0 %v85
    %194 = vmatprep.subr.mxu0 0.0
    %195 = vmatpush1.msra.mxu0 %v86
    %196 = vmatprep.subr.mxu0 0.0
    %197 = vmatpush1.msra.mxu0 %v87
    %198 = vmatprep.subr.mxu0 0.0
    %199 = vmatpush1.msra.mxu0 %v88
    %200 = vmatprep.subr.mxu0 0.0
    %201 = vmatpush1.msra.mxu0 %v89
    %202 = vmatprep.subr.mxu0 0.0
    %203 = vmatpush1.msra.mxu0 %v90
    %204 = vmatprep.subr.mxu0 0.0
    %205 = vmatpush1.msra.mxu0 %v91
    %206 = vmatprep.subr.mxu0 0.0
    %207 = vmatpush1.msra.mxu0 %v92
    %208 = vmatprep.subr.mxu0 0.0
    %209 = vmatpush1.msra.mxu0 %v93
    %210 = vmatprep.subr.mxu0 0.0
    %211 = vmatpush1.msra.mxu0 %v94
    %212 = vmatprep.subr.mxu0 0.0
    %213 = vmatpush1.msra.mxu0 %v95
    %214 = vmatprep.subr.mxu0 0.0
    %215 = vmatpush1.msra.mxu0 %v96
    %216 = vmatprep.subr.mxu0 0.0
    %217 = vmatpush1.msra.mxu0 %v97
    %218 = vmatprep.subr.mxu0 0.0
    %219 = vmatpush1.msra.mxu0 %v98
    %220 = vmatprep.subr.mxu0 0.0
    %221 = vmatpush1.msra.mxu0 %v99
    %222 = vmatprep.subr.mxu0 0.0
    %223 = vmatpush1.msra.mxu0 %v100
    %224 = vmatprep.subr.mxu0 0.0
    %225 = vmatpush1.msra.mxu0 0.0
    %226 = vmatprep.subr.mxu0 0.0
    %227 = vmatpush1.msra.mxu0 0.0
    %228 = vmatprep.subr.mxu0 0.0
    %229 = vmatpush1.msra.mxu0 0.0
    %230 = vmatprep.subr.mxu0 0.0
    %231 = vmatpush1.msra.mxu0 0.0
    %232 = vmatprep.subr.mxu0 0.0
    %233 = vmatpush1.msra.mxu0 0.0
    %234 = vmatprep.subr.mxu0 0.0
    %235 = vmatpush1.msra.mxu0 0.0
    %236 = vmatprep.subr.mxu0 0.0
    %237 = vmatpush1.msra.mxu0 0.0
    %238 = vmatprep.subr.mxu0 0.0
    %239 = vmatpush1.msra.mxu0 0.0
    %240 = vmatprep.subr.mxu0 0.0
    %241 = vmatpush1.msra.mxu0 0.0
    %242 = vmatprep.subr.mxu0 0.0
    %243 = vmatpush1.msra.mxu0 0.0
    %244 = vmatprep.subr.mxu0 0.0
    %245 = vmatpush1.msra.mxu0 0.0
    %246 = vmatprep.subr.mxu0 0.0
    %247 = vmatpush1.msra.mxu0 0.0
    %248 = vmatprep.subr.mxu0 0.0
    %249 = vmatpush1.msra.mxu0 0.0
    %250 = vmatprep.subr.mxu0 0.0
    %251 = vmatpush1.msra.mxu0 0.0
    %252 = vmatprep.subr.mxu0 0.0
    %253 = vmatpush1.msra.mxu0 0.0
    %254 = vmatprep.subr.mxu0 0.0
    %255 = vmatpush1.msra.mxu0 0.0
    %256 = vmatprep.mubr.f32.mxu0 0.0
    %257 = vmatmul.mubr.f32.gmra.mrb[0].mxu0 %v190
    %v258 = vpop.f32.mrb[0].mxu0
    %v259 = vadd.f32 %v132, %v258
    %v260 = vpop.f32.mrb[0].mxu0
    %261 = vdwg.mxu0
    %v262 = vmax.f32 %v259, 0.0
    %263 = vmatprep.subr.mxu0 0.0
    %264 = vmatpush1.msra.mxu0 %v104
    %265 = vmatprep.subr.mxu0 0.0
    %266 = vmatpush1.msra.mxu0 %v105
    %267 = vmatprep.subr.mxu0 0.0
    %268 = vmatpush1.msra.mxu0 %v106
    %269 = vmatprep.subr.mxu0 0.0
    %270 = vmatpush1.msra.mxu0 %v107
    %271 = vmatprep.subr.mxu0 0.0
    %272 = vmatpush1.msra.mxu0 %v108
    %273 = vmatprep.subr.mxu0 0.0
    %274 = vmatpush1.msra.mxu0 %v109
    %275 = vmatprep.subr.mxu0 0.0
    %276 = vmatpush1.msra.mxu0 %v110
    %277 = vmatprep.subr.mxu0 0.0
    %278 = vmatpush1.msra.mxu0 %v111
    %279 = vmatprep.subr.mxu0 0.0
    %280 = vmatpush1.msra.mxu0 %v112
    %281 = vmatprep.subr.mxu0 0.0
    %282 = vmatpush1.msra.mxu0 %v113
    %283 = vmatprep.subr.mxu0 0.0
    %284 = vmatpush1.msra.mxu0 %v114
    %285 = vmatprep.subr.mxu0 0.0
    %286 = vmatpush1.msra.mxu0 %v115
    %287 = vmatprep.subr.mxu0 0.0
    %288 = vmatpush1.msra.mxu0 %v116
    %289 = vmatprep.subr.mxu0 0.0
    %290 = vmatpush1.msra.mxu0 %v117
    %291 = vmatprep.subr.mxu0 0.0
    %292 = vmatpush1.msra.mxu0 %v118
    %293 = vmatprep.subr.mxu0 0.0
    %294 = vmatpush1.msra.mxu0 %v119
    %295 = vmatprep.subr.mxu0 0.0
    %296 = vmatpush1.msra.mxu0 0.0
    %297 = vmatprep.subr.mxu0 0.0
    %298 = vmatpush1.msra.mxu0 0.0
    %299 = vmatprep.subr.mxu0 0.0
    %300 = vmatpush1.msra.mxu0 0.0
    %301 = vmatprep.subr.mxu0 0.0
    %302 = vmatpush1.msra.mxu0 0.0
    %303 = vmatprep.subr.mxu0 0.0
    %304 = vmatpush1.msra.mxu0 0.0
    %305 = vmatprep.subr.mxu0 0.0
    %306 = vmatpush1.msra.mxu0 0.0
    %307 = vmatprep.subr.mxu0 0.0
    %308 = vmatpush1.msra.mxu0 0.0
    %309 = vmatprep.subr.mxu0 0.0
    %310 = vmatpush1.msra.mxu0 0.0
    %311 = vmatprep.subr.mxu0 0.0
    %312 = vmatpush1.msra.mxu0 0.0
    %313 = vmatprep.subr.mxu0 0.0
    %314 = vmatpush1.msra.mxu0 0.0
    %315 = vmatprep.subr.mxu0 0.0
    %316 = vmatpush1.msra.mxu0 0.0
    %317 = vmatprep.subr.mxu0 0.0
    %318 = vmatpush1.msra.mxu0 0.0
    %319 = vmatprep.subr.mxu0 0.0
    %320 = vmatpush1.msra.mxu0 0.0
    %321 = vmatprep.subr.mxu0 0.0
    %322 = vmatpush1.msra.mxu0 0.0
    %323 = vmatprep.subr.mxu0 0.0
    %324 = vmatpush1.msra.mxu0 0.0
    %325 = vmatprep.subr.mxu0 0.0
    %326 = vmatpush1.msra.mxu0 0.0
    %327 = vmatprep.mubr.f32.mxu0 0.0
    %328 = vmatmul.mubr.f32.gmra.mrb[0].mxu0 %v262
    %v329 = vpop.f32.mrb[0].mxu0
    %v330 = vadd.f32 0.0, %v329
    %v331 = vpop.f32.mrb[0].mxu0
    %332 = vdwg.mxu0
    %v333 = vsub.f32 %v262, %v330
    %v334 = vmul.f32 %v333, %v333
    %335 = vmatprep.subr.mxu0 0.0
    %336 = vmatpush1.msra.mxu0 %v104
    %337 = vmatprep.subr.mxu0 0.0
    %338 = vmatpush1.msra.mxu0 %v105
    %339 = vmatprep.subr.mxu0 0.0
    %340 = vmatpush1.msra.mxu0 %v106
    %341 = vmatprep.subr.mxu0 0.0
    %342 = vmatpush1.msra.mxu0 %v107
    %343 = vmatprep.subr.mxu0 0.0
    %344 = vmatpush1.msra.mxu0 %v108
    %345 = vmatprep.subr.mxu0 0.0
    %346 = vmatpush1.msra.mxu0 %v109
    %347 = vmatprep.subr.mxu0 0.0
    %348 = vmatpush1.msra.mxu0 %v110
    %349 = vmatprep.subr.mxu0 0.0
    %350 = vmatpush1.msra.mxu0 %v111
    %351 = vmatprep.subr.mxu0 0.0
    %352 = vmatpush1.msra.mxu0 %v112
    %353 = vmatprep.subr.mxu0 0.0
    %354 = vmatpush1.msra.mxu0 %v113
    %355 = vmatprep.subr.mxu0 0.0
    %356 = vmatpush1.msra.mxu0 %v114
    %357 = vmatprep.subr.mxu0 0.0
    %358 = vmatpush1.msra.mxu0 %v115
    %359 = vmatprep.subr.mxu0 0.0
    %360 = vmatpush1.msra.mxu0 %v116
    %361 = vmatprep.subr.mxu0 0.0
    %362 = vmatpush1.msra.mxu0 %v117
    %363 = vmatprep.subr.mxu0 0.0
    %364 = vmatpush1.msra.mxu0 %v118
    %365 = vmatprep.subr.mxu0 0.0
    %366 = vmatpush1.msra.mxu0 %v119
    %367 = vmatprep.subr.mxu0 0.0
    %368 = vmatpush1.msra.mxu0 0.0
    %369 = vmatprep.subr.mxu0 0.0
    %370 = vmatpush1.msra.mxu0 0.0
    %371 = vmatprep.subr.mxu0 0.0
    %372 = vmatpush1.msra.mxu0 0.0
    %373 = vmatprep.subr.mxu0 0.0
    %374 = vmatpush1.msra.mxu0 0.0
    %375 = vmatprep.subr.mxu0 0.0
    %376 = vmatpush1.msra.mxu0 0.0
    %377 = vmatprep.subr.mxu0 0.0
    %378 = vmatpush1.msra.mxu0 0.0
    %379 = vmatprep.subr.mxu0 0.0
    %380 = vmatpush1.msra.mxu0 0.0
    %381 = vmatprep.subr.mxu0 0.0
    %382 = vmatpush1.msra.mxu0 0.0
    %383 = vmatprep.subr.mxu0 0.0
    %384 = vmatpush1.msra.mxu0 0.0
    %385 = vmatprep.subr.mxu0 0.0
    %386 = vmatpush1.msra.mxu0 0.0
    %387 = vmatprep.subr.mxu0 0.0
    %388 = vmatpush1.msra.mxu0 0.0
    %389 = vmatprep.subr.mxu0 0.0
    %390 = vmatpush1.msra.mxu0 0.0
    %391 = vmatprep.subr.mxu0 0.0
    %392 = vmatpush1.msra.mxu0 0.0
    %393 = vmatprep.subr.mxu0 0.0
    %394 = vmatpush1.msra.mxu0 0.0
    %395 = vmatprep.subr.mxu0 0.0
    %396 = vmatpush1.msra.mxu0 0.0
    %397 = vmatprep.subr.mxu0 0.0
    %398 = vmatpush1.msra.mxu0 0.0
    %399 = vmatprep.mubr.f32.mxu0 0.0
    %400 = vmatmul.mubr.f32.gmra.mrb[0].mxu0 %v334
    %v401 = vpop.f32.mrb[0].mxu0
    %v402 = vadd.f32 1e-05, %v401
    %v403 = vpop.f32.mrb[0].mxu0
    %404 = vdwg.mxu0
    %v405 = vrsqrt.pop %v402
    %v406 = vmul.f32 %v333, %v405
    %v408 = vlaneseq
    %v409 = vshrl.u32 %v408, 7
    %v410 = vsub.s32 0, %v409
    %v411 = vrot.slane %v102, %v410
    %v413 = vmul.f32 %v406, %v411
    %v415 = vlaneseq
    %v416 = vshrl.u32 %v415, 7
    %v417 = vsub.s32 0, %v416
    %v418 = vrot.slane %v103, %v417
    %v420 = vadd.f32 %v413, %v418
    %421 = vst [vmem:[#allocation2] sm:$0xff] %v420
    %v422 = vld [vmem:[#allocation3 + $0x1] sm:$0x1]
    %v423 = vld [vmem:[#allocation3 + $0x5] sm:$0x1]
    %v424 = vld [vmem:[#allocation3 + $0x9] sm:$0x1]
    %v425 = vld [vmem:[#allocation3 + $0xd] sm:$0x1]
    %v426 = vld [vmem:[#allocation3 + $0x11] sm:$0x1]
    %v427 = vld [vmem:[#allocation3 + $0x15] sm:$0x1]
    %v428 = vld [vmem:[#allocation3 + $0x19] sm:$0x1]
    %v429 = vld [vmem:[#allocation3 + $0x1d] sm:$0x1]
    %v438 = vcombine.low %v422, %v423
    %v439 = vcombine.low %v424, %v425
    %v440 = vcombine.low %v426, %v427
    %v441 = vcombine.low %v428, %v429
    %v443 = vunpack.c.l.s4 1966171168
    %v444 = vunpack.c.0.s8 %v443
    %v445 = vlaneseq
    %v446 = vshrl.u32 %v445, 7
    %v447 = vsub.s32 %v444, %v446
    %v448 = vrot.slane %v438, %v447
    %v450 = vunpack.c.l.s4 1966171168
    %v451 = vunpack.c.0.s8 %v450
    %v452 = vlaneseq
    %v453 = vshrl.u32 %v452, 7
    %v454 = vsub.s32 %v451, %v453
    %v455 = vrot.slane %v439, %v454
    %v457 = vunpack.c.l.s4 1966171168
    %v458 = vunpack.c.0.s8 %v457
    %v459 = vlaneseq
    %v460 = vshrl.u32 %v459, 7
    %v461 = vsub.s32 %v458, %v460
    %v462 = vrot.slane %v440, %v461
    %v464 = vunpack.c.l.s4 1966171168
    %v465 = vunpack.c.0.s8 %v464
    %v466 = vlaneseq
    %v467 = vshrl.u32 %v466, 7
    %v468 = vsub.s32 %v465, %v467
    %v469 = vrot.slane %v441, %v468
    %v470 = vcombine.low %v448, %v455
    %v471 = vcombine.low %v462, %v469
    %v473 = vunpack.c.l.s4 1966171168
    %v474 = vunpack.c.0.s8 %v473
    %v475 = vlaneseq
    %v476 = vshrl.u32 %v475, 7
    %v477 = vsub.s32 %v474, %v476
    %v478 = vrot.slane %v470, %v477
    %v480 = vunpack.c.l.s4 1966171168
    %v481 = vunpack.c.0.s8 %v480
    %v482 = vlaneseq
    %v483 = vshrl.u32 %v482, 7
    %v484 = vsub.s32 %v481, %v483
    %v485 = vrot.slane %v471, %v484
    %v486 = vcombine.low %v478, %v485
    %488 = vmatprep.subr.mxu0 0.0
    %489 = vmatpush1.msra.mxu0 %v85
    %490 = vmatprep.subr.mxu0 0.0
    %491 = vmatpush1.msra.mxu0 %v86
    %492 = vmatprep.subr.mxu0 0.0
    %493 = vmatpush1.msra.mxu0 %v87
    %494 = vmatprep.subr.mxu0 0.0
    %495 = vmatpush1.msra.mxu0 %v88
    %496 = vmatprep.subr.mxu0 0.0
    %497 = vmatpush1.msra.mxu0 %v89
    %498 = vmatprep.subr.mxu0 0.0
    %499 = vmatpush1.msra.mxu0 %v90
    %500 = vmatprep.subr.mxu0 0.0
    %501 = vmatpush1.msra.mxu0 %v91
    %502 = vmatprep.subr.mxu0 0.0
    %503 = vmatpush1.msra.mxu0 %v92
    %504 = vmatprep.subr.mxu0 0.0
    %505 = vmatpush1.msra.mxu0 %v93
    %506 = vmatprep.subr.mxu0 0.0
    %507 = vmatpush1.msra.mxu0 %v94
    %508 = vmatprep.subr.mxu0 0.0
    %509 = vmatpush1.msra.mxu0 %v95
    %510 = vmatprep.subr.mxu0 0.0
    %511 = vmatpush1.msra.mxu0 %v96
    %512 = vmatprep.subr.mxu0 0.0
    %513 = vmatpush1.msra.mxu0 %v97
    %514 = vmatprep.subr.mxu0 0.0
    %515 = vmatpush1.msra.mxu0 %v98
    %516 = vmatprep.subr.mxu0 0.0
    %517 = vmatpush1.msra.mxu0 %v99
    %518 = vmatprep.subr.mxu0 0.0
    %519 = vmatpush1.msra.mxu0 %v100
    %520 = vmatprep.subr.mxu0 0.0
    %521 = vmatpush1.msra.mxu0 0.0
    %522 = vmatprep.subr.mxu0 0.0
    %523 = vmatpush1.msra.mxu0 0.0
    %524 = vmatprep.subr.mxu0 0.0
    %525 = vmatpush1.msra.mxu0 0.0
    %526 = vmatprep.subr.mxu0 0.0
    %527 = vmatpush1.msra.mxu0 0.0
    %528 = vmatprep.subr.mxu0 0.0
    %529 = vmatpush1.msra.mxu0 0.0
    %530 = vmatprep.subr.mxu0 0.0
    %531 = vmatpush1.msra.mxu0 0.0
    %532 = vmatprep.subr.mxu0 0.0
    %533 = vmatpush1.msra.mxu0 0.0
    %534 = vmatprep.subr.mxu0 0.0
    %535 = vmatpush1.msra.mxu0 0.0
    %536 = vmatprep.subr.mxu0 0.0
    %537 = vmatpush1.msra.mxu0 0.0
    %538 = vmatprep.subr.mxu0 0.0
    %539 = vmatpush1.msra.mxu0 0.0
    %540 = vmatprep.subr.mxu0 0.0
    %541 = vmatpush1.msra.mxu0 0.0
    %542 = vmatprep.subr.mxu0 0.0
    %543 = vmatpush1.msra.mxu0 0.0
    %544 = vmatprep.subr.mxu0 0.0
    %545 = vmatpush1.msra.mxu0 0.0
    %546 = vmatprep.subr.mxu0 0.0
    %547 = vmatpush1.msra.mxu0 0.0
    %548 = vmatprep.subr.mxu0 0.0
    %549 = vmatpush1.msra.mxu0 0.0
    %550 = vmatprep.subr.mxu0 0.0
    %551 = vmatpush1.msra.mxu0 0.0
    %552 = vmatprep.mubr.f32.mxu0 0.0
    %553 = vmatmul.mubr.f32.gmra.mrb[0].mxu0 %v486
    %v554 = vpop.f32.mrb[0].mxu0
    %v555 = vadd.f32 %v132, %v554
    %v556 = vpop.f32.mrb[0].mxu0
    %557 = vdwg.mxu0
    %v558 = vmax.f32 %v555, 0.0
    %559 = vmatprep.subr.mxu0 0.0
    %560 = vmatpush1.msra.mxu0 %v104
    %561 = vmatprep.subr.mxu0 0.0
    %562 = vmatpush1.msra.mxu0 %v105
    %563 = vmatprep.subr.mxu0 0.0
    %564 = vmatpush1.msra.mxu0 %v106
    %565 = vmatprep.subr.mxu0 0.0
    %566 = vmatpush1.msra.mxu0 %v107
    %567 = vmatprep.subr.mxu0 0.0
    %568 = vmatpush1.msra.mxu0 %v108
    %569 = vmatprep.subr.mxu0 0.0
    %570 = vmatpush1.msra.mxu0 %v109
    %571 = vmatprep.subr.mxu0 0.0
    %572 = vmatpush1.msra.mxu0 %v110
    %573 = vmatprep.subr.mxu0 0.0
    %574 = vmatpush1.msra.mxu0 %v111
    %575 = vmatprep.subr.mxu0 0.0
    %576 = vmatpush1.msra.mxu0 %v112
    %577 = vmatprep.subr.mxu0 0.0
    %578 = vmatpush1.msra.mxu0 %v113
    %579 = vmatprep.subr.mxu0 0.0
    %580 = vmatpush1.msra.mxu0 %v114
    %581 = vmatprep.subr.mxu0 0.0
    %582 = vmatpush1.msra.mxu0 %v115
    %583 = vmatprep.subr.mxu0 0.0
    %584 = vmatpush1.msra.mxu0 %v116
    %585 = vmatprep.subr.mxu0 0.0
    %586 = vmatpush1.msra.mxu0 %v117
    %587 = vmatprep.subr.mxu0 0.0
    %588 = vmatpush1.msra.mxu0 %v118
    %589 = vmatprep.subr.mxu0 0.0
    %590 = vmatpush1.msra.mxu0 %v119
    %591 = vmatprep.subr.mxu0 0.0
    %592 = vmatpush1.msra.mxu0 0.0
    %593 = vmatprep.subr.mxu0 0.0
    %594 = vmatpush1.msra.mxu0 0.0
    %595 = vmatprep.subr.mxu0 0.0
    %596 = vmatpush1.msra.mxu0 0.0
    %597 = vmatprep.subr.mxu0 0.0
    %598 = vmatpush1.msra.mxu0 0.0
    %599 = vmatprep.subr.mxu0 0.0
    %600 = vmatpush1.msra.mxu0 0.0
    %601 = vmatprep.subr.mxu0 0.0
    %602 = vmatpush1.msra.mxu0 0.0
    %603 = vmatprep.subr.mxu0 0.0
    %604 = vmatpush1.msra.mxu0 0.0
    %605 = vmatprep.subr.mxu0 0.0
    %606 = vmatpush1.msra.mxu0 0.0
    %607 = vmatprep.subr.mxu0 0.0
    %608 = vmatpush1.msra.mxu0 0.0
    %609 = vmatprep.subr.mxu0 0.0
    %610 = vmatpush1.msra.mxu0 0.0
    %611 = vmatprep.subr.mxu0 0.0
    %612 = vmatpush1.msra.mxu0 0.0
    %613 = vmatprep.subr.mxu0 0.0
    %614 = vmatpush1.msra.mxu0 0.0
    %615 = vmatprep.subr.mxu0 0.0
    %616 = vmatpush1.msra.mxu0 0.0
    %617 = vmatprep.subr.mxu0 0.0
    %618 = vmatpush1.msra.mxu0 0.0
    %619 = vmatprep.subr.mxu0 0.0
    %620 = vmatpush1.msra.mxu0 0.0
    %621 = vmatprep.subr.mxu0 0.0
    %622 = vmatpush1.msra.mxu0 0.0
    %623 = vmatprep.mubr.f32.mxu0 0.0
    %624 = vmatmul.mubr.f32.gmra.mrb[0].mxu0 %v558
    %v625 = vpop.f32.mrb[0].mxu0
    %v626 = vadd.f32 0.0, %v625
    %v627 = vpop.f32.mrb[0].mxu0
    %628 = vdwg.mxu0
    %v629 = vsub.f32 %v558, %v626
    %v630 = vmul.f32 %v629, %v629
    %631 = vmatprep.subr.mxu0 0.0
    %632 = vmatpush1.msra.mxu0 %v104
    %633 = vmatprep.subr.mxu0 0.0
    %634 = vmatpush1.msra.mxu0 %v105
    %635 = vmatprep.subr.mxu0 0.0
    %636 = vmatpush1.msra.mxu0 %v106
    %637 = vmatprep.subr.mxu0 0.0
    %638 = vmatpush1.msra.mxu0 %v107
    %639 = vmatprep.subr.mxu0 0.0
    %640 = vmatpush1.msra.mxu0 %v108
    %641 = vmatprep.subr.mxu0 0.0
    %642 = vmatpush1.msra.mxu0 %v109
    %643 = vmatprep.subr.mxu0 0.0
    %644 = vmatpush1.msra.mxu0 %v110
    %645 = vmatprep.subr.mxu0 0.0
    %646 = vmatpush1.msra.mxu0 %v111
    %647 = vmatprep.subr.mxu0 0.0
    %648 = vmatpush1.msra.mxu0 %v112
    %649 = vmatprep.subr.mxu0 0.0
    %650 = vmatpush1.msra.mxu0 %v113
    %651 = vmatprep.subr.mxu0 0.0
    %652 = vmatpush1.msra.mxu0 %v114
    %653 = vmatprep.subr.mxu0 0.0
    %654 = vmatpush1.msra.mxu0 %v115
    %655 = vmatprep.subr.mxu0 0.0
    %656 = vmatpush1.msra.mxu0 %v116
    %657 = vmatprep.subr.mxu0 0.0
    %658 = vmatpush1.msra.mxu0 %v117
    %659 = vmatprep.subr.mxu0 0.0
    %660 = vmatpush1.msra.mxu0 %v118
    %661 = vmatprep.subr.mxu0 0.0
    %662 = vmatpush1.msra.mxu0 %v119
    %663 = vmatprep.subr.mxu0 0.0
    %664 = vmatpush1.msra.mxu0 0.0
    %665 = vmatprep.subr.mxu0 0.0
    %666 = vmatpush1.msra.mxu0 0.0
    %667 = vmatprep.subr.mxu0 0.0
    %668 = vmatpush1.msra.mxu0 0.0
    %669 = vmatprep.subr.mxu0 0.0
    %670 = vmatpush1.msra.mxu0 0.0
    %671 = vmatprep.subr.mxu0 0.0
    %672 = vmatpush1.msra.mxu0 0.0
    %673 = vmatprep.subr.mxu0 0.0
    %674 = vmatpush1.msra.mxu0 0.0
    %675 = vmatprep.subr.mxu0 0.0
    %676 = vmatpush1.msra.mxu0 0.0
    %677 = vmatprep.subr.mxu0 0.0
    %678 = vmatpush1.msra.mxu0 0.0
    %679 = vmatprep.subr.mxu0 0.0
    %680 = vmatpush1.msra.mxu0 0.0
    %681 = vmatprep.subr.mxu0 0.0
    %682 = vmatpush1.msra.mxu0 0.0
    %683 = vmatprep.subr.mxu0 0.0
    %684 = vmatpush1.msra.mxu0 0.0
    %685 = vmatprep.subr.mxu0 0.0
    %686 = vmatpush1.msra.mxu0 0.0
    %687 = vmatprep.subr.mxu0 0.0
    %688 = vmatpush1.msra.mxu0 0.0
    %689 = vmatprep.subr.mxu0 0.0
    %690 = vmatpush1.msra.mxu0 0.0
    %691 = vmatprep.subr.mxu0 0.0
    %692 = vmatpush1.msra.mxu0 0.0
    %693 = vmatprep.subr.mxu0 0.0
    %694 = vmatpush1.msra.mxu0 0.0
    %695 = vmatprep.mubr.f32.mxu0 0.0
    %696 = vmatmul.mubr.f32.gmra.mrb[0].mxu0 %v630
    %v697 = vpop.f32.mrb[0].mxu0
    %v698 = vadd.f32 1e-05, %v697
    %v699 = vpop.f32.mrb[0].mxu0
    %700 = vdwg.mxu0
    %v701 = vrsqrt.pop %v698
    %v702 = vmul.f32 %v629, %v701
    %v703 = vmul.f32 %v702, %v411
    %v704 = vadd.f32 %v703, %v418
    %705 = vst [vmem:[#allocation2 + $0x8] sm:$0xff] %v704
    %v706 = vld [vmem:[#allocation3 + $0x2] sm:$0x1]
    %v707 = vld [vmem:[#allocation3 + $0x6] sm:$0x1]
    %v708 = vld [vmem:[#allocation3 + $0xa] sm:$0x1]
    %v709 = vld [vmem:[#allocation3 + $0xe] sm:$0x1]
    %v710 = vld [vmem:[#allocation3 + $0x12] sm:$0x1]
    %v711 = vld [vmem:[#allocation3 + $0x16] sm:$0x1]
    %v712 = vld [vmem:[#allocation3 + $0x1a] sm:$0x1]
    %v713 = vld [vmem:[#allocation3 + $0x1e] sm:$0x1]
    %v722 = vcombine.low %v706, %v707
    %v723 = vcombine.low %v708, %v709
    %v724 = vcombine.low %v710, %v711
    %v725 = vcombine.low %v712, %v713
    %v727 = vunpack.c.l.s4 1966171168
    %v728 = vunpack.c.0.s8 %v727
    %v729 = vlaneseq
    %v730 = vshrl.u32 %v729, 7
    %v731 = vsub.s32 %v728, %v730
    %v732 = vrot.slane %v722, %v731
    %v734 = vunpack.c.l.s4 1966171168
    %v735 = vunpack.c.0.s8 %v734
    %v736 = vlaneseq
    %v737 = vshrl.u32 %v736, 7
    %v738 = vsub.s32 %v735, %v737
    %v739 = vrot.slane %v723, %v738
    %v741 = vunpack.c.l.s4 1966171168
    %v742 = vunpack.c.0.s8 %v741
    %v743 = vlaneseq
    %v744 = vshrl.u32 %v743, 7
    %v745 = vsub.s32 %v742, %v744
    %v746 = vrot.slane %v724, %v745
    %v748 = vunpack.c.l.s4 1966171168
    %v749 = vunpack.c.0.s8 %v748
    %v750 = vlaneseq
    %v751 = vshrl.u32 %v750, 7
    %v752 = vsub.s32 %v749, %v751
    %v753 = vrot.slane %v725, %v752
    %v754 = vcombine.low %v732, %v739
    %v755 = vcombine.low %v746, %v753
    %v757 = vunpack.c.l.s4 1966171168
    %v758 = vunpack.c.0.s8 %v757
    %v759 = vlaneseq
    %v760 = vshrl.u32 %v759, 7
    %v761 = vsub.s32 %v758, %v760
    %v762 = vrot.slane %v754, %v761
    %v764 = vunpack.c.l.s4 1966171168
    %v765 = vunpack.c.0.s8 %v764
    %v766 = vlaneseq
    %v767 = vshrl.u32 %v766, 7
    %v768 = vsub.s32 %v765, %v767
    %v769 = vrot.slane %v755, %v768
    %v770 = vcombine.low %v762, %v769
    %772 = vmatprep.subr.mxu0 0.0
    %773 = vmatpush1.msra.mxu0 %v85
    %774 = vmatprep.subr.mxu0 0.0
    %775 = vmatpush1.msra.mxu0 %v86
    %776 = vmatprep.subr.mxu0 0.0
    %777 = vmatpush1.msra.mxu0 %v87
    %778 = vmatprep.subr.mxu0 0.0
    %779 = vmatpush1.msra.mxu0 %v88
    %780 = vmatprep.subr.mxu0 0.0
    %781 = vmatpush1.msra.mxu0 %v89
    %782 = vmatprep.subr.mxu0 0.0
    %783 = vmatpush1.msra.mxu0 %v90
    %784 = vmatprep.subr.mxu0 0.0
    %785 = vmatpush1.msra.mxu0 %v91
    %786 = vmatprep.subr.mxu0 0.0
    %787 = vmatpush1.msra.mxu0 %v92
    %788 = vmatprep.subr.mxu0 0.0
    %789 = vmatpush1.msra.mxu0 %v93
    %790 = vmatprep.subr.mxu0 0.0
    %791 = vmatpush1.msra.mxu0 %v94
    %792 = vmatprep.subr.mxu0 0.0
    %793 = vmatpush1.msra.mxu0 %v95
    %794 = vmatprep.subr.mxu0 0.0
    %795 = vmatpush1.msra.mxu0 %v96
    %796 = vmatprep.subr.mxu0 0.0
    %797 = vmatpush1.msra.mxu0 %v97
    %798 = vmatprep.subr.mxu0 0.0
    %799 = vmatpush1.msra.mxu0 %v98
    %800 = vmatprep.subr.mxu0 0.0
    %801 = vmatpush1.msra.mxu0 %v99
    %802 = vmatprep.subr.mxu0 0.0
    %803 = vmatpush1.msra.mxu0 %v100
    %804 = vmatprep.subr.mxu0 0.0
    %805 = vmatpush1.msra.mxu0 0.0
    %806 = vmatprep.subr.mxu0 0.0
    %807 = vmatpush1.msra.mxu0 0.0
    %808 = vmatprep.subr.mxu0 0.0
    %809 = vmatpush1.msra.mxu0 0.0
    %810 = vmatprep.subr.mxu0 0.0
    %811 = vmatpush1.msra.mxu0 0.0
    %812 = vmatprep.subr.mxu0 0.0
    %813 = vmatpush1.msra.mxu0 0.0
    %814 = vmatprep.subr.mxu0 0.0
    %815 = vmatpush1.msra.mxu0 0.0
    %816 = vmatprep.subr.mxu0 0.0
    %817 = vmatpush1.msra.mxu0 0.0
    %818 = vmatprep.subr.mxu0 0.0
    %819 = vmatpush1.msra.mxu0 0.0
    %820 = vmatprep.subr.mxu0 0.0
    %821 = vmatpush1.msra.mxu0 0.0
    %822 = vmatprep.subr.mxu0 0.0
    %823 = vmatpush1.msra.mxu0 0.0
    %824 = vmatprep.subr.mxu0 0.0
    %825 = vmatpush1.msra.mxu0 0.0
    %826 = vmatprep.subr.mxu0 0.0
    %827 = vmatpush1.msra.mxu0 0.0
    %828 = vmatprep.subr.mxu0 0.0
    %829 = vmatpush1.msra.mxu0 0.0
    %830 = vmatprep.subr.mxu0 0.0
    %831 = vmatpush1.msra.mxu0 0.0
    %832 = vmatprep.subr.mxu0 0.0
    %833 = vmatpush1.msra.mxu0 0.0
    %834 = vmatprep.subr.mxu0 0.0
    %835 = vmatpush1.msra.mxu0 0.0
    %836 = vmatprep.mubr.f32.mxu0 0.0
    %837 = vmatmul.mubr.f32.gmra.mrb[0].mxu0 %v770
    %v838 = vpop.f32.mrb[0].mxu0
    %v839 = vadd.f32 %v132, %v838
    %v840 = vpop.f32.mrb[0].mxu0
    %841 = vdwg.mxu0
    %v842 = vmax.f32 %v839, 0.0
    %843 = vmatprep.subr.mxu0 0.0
    %844 = vmatpush1.msra.mxu0 %v104
    %845 = vmatprep.subr.mxu0 0.0
    %846 = vmatpush1.msra.mxu0 %v105
    %847 = vmatprep.subr.mxu0 0.0
    %848 = vmatpush1.msra.mxu0 %v106
    %849 = vmatprep.subr.mxu0 0.0
    %850 = vmatpush1.msra.mxu0 %v107
    %851 = vmatprep.subr.mxu0 0.0
    %852 = vmatpush1.msra.mxu0 %v108
    %853 = vmatprep.subr.mxu0 0.0
    %854 = vmatpush1.msra.mxu0 %v109
    %855 = vmatprep.subr.mxu0 0.0
    %856 = vmatpush1.msra.mxu0 %v110
    %857 = vmatprep.subr.mxu0 0.0
    %858 = vmatpush1.msra.mxu0 %v111
    %859 = vmatprep.subr.mxu0 0.0
    %860 = vmatpush1.msra.mxu0 %v112
    %861 = vmatprep.subr.mxu0 0.0
    %862 = vmatpush1.msra.mxu0 %v113
    %863 = vmatprep.subr.mxu0 0.0
    %864 = vmatpush1.msra.mxu0 %v114
    %865 = vmatprep.subr.mxu0 0.0
    %866 = vmatpush1.msra.mxu0 %v115
    %867 = vmatprep.subr.mxu0 0.0
    %868 = vmatpush1.msra.mxu0 %v116
    %869 = vmatprep.subr.mxu0 0.0
    %870 = vmatpush1.msra.mxu0 %v117
    %871 = vmatprep.subr.mxu0 0.0
    %872 = vmatpush1.msra.mxu0 %v118
    %873 = vmatprep.subr.mxu0 0.0
    %874 = vmatpush1.msra.mxu0 %v119
    %875 = vmatprep.subr.mxu0 0.0
    %876 = vmatpush1.msra.mxu0 0.0
    %877 = vmatprep.subr.mxu0 0.0
    %878 = vmatpush1.msra.mxu0 0.0
    %879 = vmatprep.subr.mxu0 0.0
    %880 = vmatpush1.msra.mxu0 0.0
    %881 = vmatprep.subr.mxu0 0.0
    %882 = vmatpush1.msra.mxu0 0.0
    %883 = vmatprep.subr.mxu0 0.0
    %884 = vmatpush1.msra.mxu0 0.0
    %885 = vmatprep.subr.mxu0 0.0
    %886 = vmatpush1.msra.mxu0 0.0
    %887 = vmatprep.subr.mxu0 0.0
    %888 = vmatpush1.msra.mxu0 0.0
    %889 = vmatprep.subr.mxu0 0.0
    %890 = vmatpush1.msra.mxu0 0.0
    %891 = vmatprep.subr.mxu0 0.0
    %892 = vmatpush1.msra.mxu0 0.0
    %893 = vmatprep.subr.mxu0 0.0
    %894 = vmatpush1.msra.mxu0 0.0
    %895 = vmatprep.subr.mxu0 0.0
    %896 = vmatpush1.msra.mxu0 0.0
    %897 = vmatprep.subr.mxu0 0.0
    %898 = vmatpush1.msra.mxu0 0.0
    %899 = vmatprep.subr.mxu0 0.0
    %900 = vmatpush1.msra.mxu0 0.0
    %901 = vmatprep.subr.mxu0 0.0
    %902 = vmatpush1.msra.mxu0 0.0
    %903 = vmatprep.subr.mxu0 0.0
    %904 = vmatpush1.msra.mxu0 0.0
    %905 = vmatprep.subr.mxu0 0.0
    %906 = vmatpush1.msra.mxu0 0.0
    %907 = vmatprep.mubr.f32.mxu0 0.0
    %908 = vmatmul.mubr.f32.gmra.mrb[0].mxu0 %v842
    %v909 = vpop.f32.mrb[0].mxu0
    %v910 = vadd.f32 0.0, %v909
    %v911 = vpop.f32.mrb[0].mxu0
    %912 = vdwg.mxu0
    %v913 = vsub.f32 %v842, %v910
    %v914 = vmul.f32 %v913, %v913
    %915 = vmatprep.subr.mxu0 0.0
    %916 = vmatpush1.msra.mxu0 %v104
    %917 = vmatprep.subr.mxu0 0.0
    %918 = vmatpush1.msra.mxu0 %v105
    %919 = vmatprep.subr.mxu0 0.0
    %920 = vmatpush1.msra.mxu0 %v106
    %921 = vmatprep.subr.mxu0 0.0
    %922 = vmatpush1.msra.mxu0 %v107
    %923 = vmatprep.subr.mxu0 0.0
    %924 = vmatpush1.msra.mxu0 %v108
    %925 = vmatprep.subr.mxu0 0.0
    %926 = vmatpush1.msra.mxu0 %v109
    %927 = vmatprep.subr.mxu0 0.0
    %928 = vmatpush1.msra.mxu0 %v110
    %929 = vmatprep.subr.mxu0 0.0
    %930 = vmatpush1.msra.mxu0 %v111
    %931 = vmatprep.subr.mxu0 0.0
    %932 = vmatpush1.msra.mxu0 %v112
    %933 = vmatprep.subr.mxu0 0.0
    %934 = vmatpush1.msra.mxu0 %v113
    %935 = vmatprep.subr.mxu0 0.0
    %936 = vmatpush1.msra.mxu0 %v114
    %937 = vmatprep.subr.mxu0 0.0
    %938 = vmatpush1.msra.mxu0 %v115
    %939 = vmatprep.subr.mxu0 0.0
    %940 = vmatpush1.msra.mxu0 %v116
    %941 = vmatprep.subr.mxu0 0.0
    %942 = vmatpush1.msra.mxu0 %v117
    %943 = vmatprep.subr.mxu0 0.0
    %944 = vmatpush1.msra.mxu0 %v118
    %945 = vmatprep.subr.mxu0 0.0
    %946 = vmatpush1.msra.mxu0 %v119
    %947 = vmatprep.subr.mxu0 0.0
    %948 = vmatpush1.msra.mxu0 0.0
    %949 = vmatprep.subr.mxu0 0.0
    %950 = vmatpush1.msra.mxu0 0.0
    %951 = vmatprep.subr.mxu0 0.0
    %952 = vmatpush1.msra.mxu0 0.0
    %953 = vmatprep.subr.mxu0 0.0
    %954 = vmatpush1.msra.mxu0 0.0
    %955 = vmatprep.subr.mxu0 0.0
    %956 = vmatpush1.msra.mxu0 0.0
    %957 = vmatprep.subr.mxu0 0.0
    %958 = vmatpush1.msra.mxu0 0.0
    %959 = vmatprep.subr.mxu0 0.0
    %960 = vmatpush1.msra.mxu0 0.0
    %961 = vmatprep.subr.mxu0 0.0
    %962 = vmatpush1.msra.mxu0 0.0
    %963 = vmatprep.subr.mxu0 0.0
    %964 = vmatpush1.msra.mxu0 0.0
    %965 = vmatprep.subr.mxu0 0.0
    %966 = vmatpush1.msra.mxu0 0.0
    %967 = vmatprep.subr.mxu0 0.0
    %968 = vmatpush1.msra.mxu0 0.0
    %969 = vmatprep.subr.mxu0 0.0
    %970 = vmatpush1.msra.mxu0 0.0
    %971 = vmatprep.subr.mxu0 0.0
    %972 = vmatpush1.msra.mxu0 0.0
    %973 = vmatprep.subr.mxu0 0.0
    %974 = vmatpush1.msra.mxu0 0.0
    %975 = vmatprep.subr.mxu0 0.0
    %976 = vmatpush1.msra.mxu0 0.0
    %977 = vmatprep.subr.mxu0 0.0
    %978 = vmatpush1.msra.mxu0 0.0
    %979 = vmatprep.mubr.f32.mxu0 0.0
    %980 = vmatmul.mubr.f32.gmra.mrb[0].mxu0 %v914
    %v981 = vpop.f32.mrb[0].mxu0
    %v982 = vadd.f32 1e-05, %v981
    %v983 = vpop.f32.mrb[0].mxu0
    %984 = vdwg.mxu0
    %v985 = vrsqrt.pop %v982
    %v986 = vmul.f32 %v913, %v985
    %v987 = vmul.f32 %v986, %v411
    %v988 = vadd.f32 %v987, %v418
    %989 = vst [vmem:[#allocation2 + $0x10] sm:$0xff] %v988
    %v990 = vld [vmem:[#allocation3 + $0x3] sm:$0x1]
    %v991 = vld [vmem:[#allocation3 + $0x7] sm:$0x1]
    %v992 = vld [vmem:[#allocation3 + $0xb] sm:$0x1]
    %v993 = vld [vmem:[#allocation3 + $0xf] sm:$0x1]
    %v994 = vld [vmem:[#allocation3 + $0x13] sm:$0x1]
    %v995 = vld [vmem:[#allocation3 + $0x17] sm:$0x1]
    %v996 = vld [vmem:[#allocation3 + $0x1b] sm:$0x1]
    %v997 = vld [vmem:[#allocation3 + $0x1f] sm:$0x1]
    %v1006 = vcombine.low %v990, %v991
    %v1007 = vcombine.low %v992, %v993
    %v1008 = vcombine.low %v994, %v995
    %v1009 = vcombine.low %v996, %v997
    %v1011 = vunpack.c.l.s4 1966171168
    %v1012 = vunpack.c.0.s8 %v1011
    %v1013 = vlaneseq
    %v1014 = vshrl.u32 %v1013, 7
    %v1015 = vsub.s32 %v1012, %v1014
    %v1016 = vrot.slane %v1006, %v1015
    %v1018 = vunpack.c.l.s4 1966171168
    %v1019 = vunpack.c.0.s8 %v1018
    %v1020 = vlaneseq
    %v1021 = vshrl.u32 %v1020, 7
    %v1022 = vsub.s32 %v1019, %v1021
    %v1023 = vrot.slane %v1007, %v1022
    %v1025 = vunpack.c.l.s4 1966171168
    %v1026 = vunpack.c.0.s8 %v1025
    %v1027 = vlaneseq
    %v1028 = vshrl.u32 %v1027, 7
    %v1029 = vsub.s32 %v1026, %v1028
    %v1030 = vrot.slane %v1008, %v1029
    %v1032 = vunpack.c.l.s4 1966171168
    %v1033 = vunpack.c.0.s8 %v1032
    %v1034 = vlaneseq
    %v1035 = vshrl.u32 %v1034, 7
    %v1036 = vsub.s32 %v1033, %v1035
    %v1037 = vrot.slane %v1009, %v1036
    %v1038 = vcombine.low %v1016, %v1023
    %v1039 = vcombine.low %v1030, %v1037
    %v1041 = vunpack.c.l.s4 1966171168
    %v1042 = vunpack.c.0.s8 %v1041
    %v1043 = vlaneseq
    %v1044 = vshrl.u32 %v1043, 7
    %v1045 = vsub.s32 %v1042, %v1044
    %v1046 = vrot.slane %v1038, %v1045
    %v1048 = vunpack.c.l.s4 1966171168
    %v1049 = vunpack.c.0.s8 %v1048
    %v1050 = vlaneseq
    %v1051 = vshrl.u32 %v1050, 7
    %v1052 = vsub.s32 %v1049, %v1051
    %v1053 = vrot.slane %v1039, %v1052
    %v1054 = vcombine.low %v1046, %v1053
    %1056 = vmatprep.subr.mxu0 0.0
    %1057 = vmatpush1.msra.mxu0 %v85
    %1058 = vmatprep.subr.mxu0 0.0
    %1059 = vmatpush1.msra.mxu0 %v86
    %1060 = vmatprep.subr.mxu0 0.0
    %1061 = vmatpush1.msra.mxu0 %v87
    %1062 = vmatprep.subr.mxu0 0.0
    %1063 = vmatpush1.msra.mxu0 %v88
    %1064 = vmatprep.subr.mxu0 0.0
    %1065 = vmatpush1.msra.mxu0 %v89
    %1066 = vmatprep.subr.mxu0 0.0
    %1067 = vmatpush1.msra.mxu0 %v90
    %1068 = vmatprep.subr.mxu0 0.0
    %1069 = vmatpush1.msra.mxu0 %v91
    %1070 = vmatprep.subr.mxu0 0.0
    %1071 = vmatpush1.msra.mxu0 %v92
    %1072 = vmatprep.subr.mxu0 0.0
    %1073 = vmatpush1.msra.mxu0 %v93
    %1074 = vmatprep.subr.mxu0 0.0
    %1075 = vmatpush1.msra.mxu0 %v94
    %1076 = vmatprep.subr.mxu0 0.0
    %1077 = vmatpush1.msra.mxu0 %v95
    %1078 = vmatprep.subr.mxu0 0.0
    %1079 = vmatpush1.msra.mxu0 %v96
    %1080 = vmatprep.subr.mxu0 0.0
    %1081 = vmatpush1.msra.mxu0 %v97
    %1082 = vmatprep.subr.mxu0 0.0
    %1083 = vmatpush1.msra.mxu0 %v98
    %1084 = vmatprep.subr.mxu0 0.0
    %1085 = vmatpush1.msra.mxu0 %v99
    %1086 = vmatprep.subr.mxu0 0.0
    %1087 = vmatpush1.msra.mxu0 %v100
    %1088 = vmatprep.subr.mxu0 0.0
    %1089 = vmatpush1.msra.mxu0 0.0
    %1090 = vmatprep.subr.mxu0 0.0
    %1091 = vmatpush1.msra.mxu0 0.0
    %1092 = vmatprep.subr.mxu0 0.0
    %1093 = vmatpush1.msra.mxu0 0.0
    %1094 = vmatprep.subr.mxu0 0.0
    %1095 = vmatpush1.msra.mxu0 0.0
    %1096 = vmatprep.subr.mxu0 0.0
    %1097 = vmatpush1.msra.mxu0 0.0
    %1098 = vmatprep.subr.mxu0 0.0
    %1099 = vmatpush1.msra.mxu0 0.0
    %1100 = vmatprep.subr.mxu0 0.0
    %1101 = vmatpush1.msra.mxu0 0.0
    %1102 = vmatprep.subr.mxu0 0.0
    %1103 = vmatpush1.msra.mxu0 0.0
    %1104 = vmatprep.subr.mxu0 0.0
    %1105 = vmatpush1.msra.mxu0 0.0
    %1106 = vmatprep.subr.mxu0 0.0
    %1107 = vmatpush1.msra.mxu0 0.0
    %1108 = vmatprep.subr.mxu0 0.0
    %1109 = vmatpush1.msra.mxu0 0.0
    %1110 = vmatprep.subr.mxu0 0.0
    %1111 = vmatpush1.msra.mxu0 0.0
    %1112 = vmatprep.subr.mxu0 0.0
    %1113 = vmatpush1.msra.mxu0 0.0
    %1114 = vmatprep.subr.mxu0 0.0
    %1115 = vmatpush1.msra.mxu0 0.0
    %1116 = vmatprep.subr.mxu0 0.0
    %1117 = vmatpush1.msra.mxu0 0.0
    %1118 = vmatprep.subr.mxu0 0.0
    %1119 = vmatpush1.msra.mxu0 0.0
    %1120 = vmatprep.mubr.f32.mxu0 0.0
    %1121 = vmatmul.mubr.f32.gmra.mrb[0].mxu0 %v1054
    %v1122 = vpop.f32.mrb[0].mxu0
    %v1123 = vadd.f32 %v132, %v1122
    %v1124 = vpop.f32.mrb[0].mxu0
    %1125 = vdwg.mxu0
    %v1126 = vmax.f32 %v1123, 0.0
    %1127 = vmatprep.subr.mxu0 0.0
    %1128 = vmatpush1.msra.mxu0 %v104
    %1129 = vmatprep.subr.mxu0 0.0
    %1130 = vmatpush1.msra.mxu0 %v105
    %1131 = vmatprep.subr.mxu0 0.0
    %1132 = vmatpush1.msra.mxu0 %v106
    %1133 = vmatprep.subr.mxu0 0.0
    %1134 = vmatpush1.msra.mxu0 %v107
    %1135 = vmatprep.subr.mxu0 0.0
    %1136 = vmatpush1.msra.mxu0 %v108
    %1137 = vmatprep.subr.mxu0 0.0
    %1138 = vmatpush1.msra.mxu0 %v109
    %1139 = vmatprep.subr.mxu0 0.0
    %1140 = vmatpush1.msra.mxu0 %v110
    %1141 = vmatprep.subr.mxu0 0.0
    %1142 = vmatpush1.msra.mxu0 %v111
    %1143 = vmatprep.subr.mxu0 0.0
    %1144 = vmatpush1.msra.mxu0 %v112
    %1145 = vmatprep.subr.mxu0 0.0
    %1146 = vmatpush1.msra.mxu0 %v113
    %1147 = vmatprep.subr.mxu0 0.0
    %1148 = vmatpush1.msra.mxu0 %v114
    %1149 = vmatprep.subr.mxu0 0.0
    %1150 = vmatpush1.msra.mxu0 %v115
    %1151 = vmatprep.subr.mxu0 0.0
    %1152 = vmatpush1.msra.mxu0 %v116
    %1153 = vmatprep.subr.mxu0 0.0
    %1154 = vmatpush1.msra.mxu0 %v117
    %1155 = vmatprep.subr.mxu0 0.0
    %1156 = vmatpush1.msra.mxu0 %v118
    %1157 = vmatprep.subr.mxu0 0.0
    %1158 = vmatpush1.msra.mxu0 %v119
    %1159 = vmatprep.subr.mxu0 0.0
    %1160 = vmatpush1.msra.mxu0 0.0
    %1161 = vmatprep.subr.mxu0 0.0
    %1162 = vmatpush1.msra.mxu0 0.0
    %1163 = vmatprep.subr.mxu0 0.0
    %1164 = vmatpush1.msra.mxu0 0.0
    %1165 = vmatprep.subr.mxu0 0.0
    %1166 = vmatpush1.msra.mxu0 0.0
    %1167 = vmatprep.subr.mxu0 0.0
    %1168 = vmatpush1.msra.mxu0 0.0
    %1169 = vmatprep.subr.mxu0 0.0
    %1170 = vmatpush1.msra.mxu0 0.0
    %1171 = vmatprep.subr.mxu0 0.0
    %1172 = vmatpush1.msra.mxu0 0.0
    %1173 = vmatprep.subr.mxu0 0.0
    %1174 = vmatpush1.msra.mxu0 0.0
    %1175 = vmatprep.subr.mxu0 0.0
    %1176 = vmatpush1.msra.mxu0 0.0
    %1177 = vmatprep.subr.mxu0 0.0
    %1178 = vmatpush1.msra.mxu0 0.0
    %1179 = vmatprep.subr.mxu0 0.0
    %1180 = vmatpush1.msra.mxu0 0.0
    %1181 = vmatprep.subr.mxu0 0.0
    %1182 = vmatpush1.msra.mxu0 0.0
    %1183 = vmatprep.subr.mxu0 0.0
    %1184 = vmatpush1.msra.mxu0 0.0
    %1185 = vmatprep.subr.mxu0 0.0
    %1186 = vmatpush1.msra.mxu0 0.0
    %1187 = vmatprep.subr.mxu0 0.0
    %1188 = vmatpush1.msra.mxu0 0.0
    %1189 = vmatprep.subr.mxu0 0.0
    %1190 = vmatpush1.msra.mxu0 0.0
    %1191 = vmatprep.mubr.f32.mxu0 0.0
    %1192 = vmatmul.mubr.f32.gmra.mrb[0].mxu0 %v1126
    %v1193 = vpop.f32.mrb[0].mxu0
    %v1194 = vadd.f32 0.0, %v1193
    %v1195 = vpop.f32.mrb[0].mxu0
    %1196 = vdwg.mxu0
    %v1197 = vsub.f32 %v1126, %v1194
    %v1198 = vmul.f32 %v1197, %v1197
    %1199 = vmatprep.subr.mxu0 0.0
    %1200 = vmatpush1.msra.mxu0 %v104
    %1201 = vmatprep.subr.mxu0 0.0
    %1202 = vmatpush1.msra.mxu0 %v105
    %1203 = vmatprep.subr.mxu0 0.0
    %1204 = vmatpush1.msra.mxu0 %v106
    %1205 = vmatprep.subr.mxu0 0.0
    %1206 = vmatpush1.msra.mxu0 %v107
    %1207 = vmatprep.subr.mxu0 0.0
    %1208 = vmatpush1.msra.mxu0 %v108
    %1209 = vmatprep.subr.mxu0 0.0
    %1210 = vmatpush1.msra.mxu0 %v109
    %1211 = vmatprep.subr.mxu0 0.0
    %1212 = vmatpush1.msra.mxu0 %v110
    %1213 = vmatprep.subr.mxu0 0.0
    %1214 = vmatpush1.msra.mxu0 %v111
    %1215 = vmatprep.subr.mxu0 0.0
    %1216 = vmatpush1.msra.mxu0 %v112
    %1217 = vmatprep.subr.mxu0 0.0
    %1218 = vmatpush1.msra.mxu0 %v113
    %1219 = vmatprep.subr.mxu0 0.0
    %1220 = vmatpush1.msra.mxu0 %v114
    %1221 = vmatprep.subr.mxu0 0.0
    %1222 = vmatpush1.msra.mxu0 %v115
    %1223 = vmatprep.subr.mxu0 0.0
    %1224 = vmatpush1.msra.mxu0 %v116
    %1225 = vmatprep.subr.mxu0 0.0
    %1226 = vmatpush1.msra.mxu0 %v117
    %1227 = vmatprep.subr.mxu0 0.0
    %1228 = vmatpush1.msra.mxu0 %v118
    %1229 = vmatprep.subr.mxu0 0.0
    %1230 = vmatpush1.msra.mxu0 %v119
    %1231 = vmatprep.subr.mxu0 0.0
    %1232 = vmatpush1.msra.mxu0 0.0
    %1233 = vmatprep.subr.mxu0 0.0
    %1234 = vmatpush1.msra.mxu0 0.0
    %1235 = vmatprep.subr.mxu0 0.0
    %1236 = vmatpush1.msra.mxu0 0.0
    %1237 = vmatprep.subr.mxu0 0.0
    %1238 = vmatpush1.msra.mxu0 0.0
    %1239 = vmatprep.subr.mxu0 0.0
    %1240 = vmatpush1.msra.mxu0 0.0
    %1241 = vmatprep.subr.mxu0 0.0
    %1242 = vmatpush1.msra.mxu0 0.0
    %1243 = vmatprep.subr.mxu0 0.0
    %1244 = vmatpush1.msra.mxu0 0.0
    %1245 = vmatprep.subr.mxu0 0.0
    %1246 = vmatpush1.msra.mxu0 0.0
    %1247 = vmatprep.subr.mxu0 0.0
    %1248 = vmatpush1.msra.mxu0 0.0
    %1249 = vmatprep.subr.mxu0 0.0
    %1250 = vmatpush1.msra.mxu0 0.0
    %1251 = vmatprep.subr.mxu0 0.0
    %1252 = vmatpush1.msra.mxu0 0.0
    %1253 = vmatprep.subr.mxu0 0.0
    %1254 = vmatpush1.msra.mxu0 0.0
    %1255 = vmatprep.subr.mxu0 0.0
    %1256 = vmatpush1.msra.mxu0 0.0
    %1257 = vmatprep.subr.mxu0 0.0
    %1258 = vmatpush1.msra.mxu0 0.0
    %1259 = vmatprep.subr.mxu0 0.0
    %1260 = vmatpush1.msra.mxu0 0.0
    %1261 = vmatprep.subr.mxu0 0.0
    %1262 = vmatpush1.msra.mxu0 0.0
    %1263 = vmatprep.mubr.f32.mxu0 0.0
    %1264 = vmatmul.mubr.f32.gmra.mrb[0].mxu0 %v1198
    %v1265 = vpop.f32.mrb[0].mxu0
    %v1266 = vadd.f32 1e-05, %v1265
    %v1267 = vpop.f32.mrb[0].mxu0
    %1268 = vdwg.mxu0
    %v1269 = vrsqrt.pop %v1266
    %v1270 = vmul.f32 %v1197, %v1269
    %v1271 = vmul.f32 %v1270, %v411
    %v1272 = vadd.f32 %v1271, %v418
    %1273 = vst [vmem:[#allocation2 + $0x18] sm:$0xff] %v1272
    %v1274 = vld [vmem:[#allocation2] sm:$0xff]
    %v1275 = vld [vmem:[#allocation2 + $0x8] sm:$0xff]
    %v1276 = vld [vmem:[#allocation2 + $0x10] sm:$0xff]
    %v1277 = vld [vmem:[#allocation2 + $0x18] sm:$0xff]
    %v1278 = vld [vmem:[#allocation8] sm:$0xff]
    %v1279 = vld [vmem:[#allocation8 + $0x8] sm:$0xff]
    %v1280 = vld [vmem:[#allocation8 + $0x10] sm:$0xff]
    %v1281 = vld [vmem:[#allocation8 + $0x18] sm:$0xff]
    %v1282 = vld [vmem:[#allocation8 + $0x20] sm:$0xff]
    %v1283 = vld [vmem:[#allocation8 + $0x28] sm:$0xff]
    %v1284 = vld [vmem:[#allocation8 + $0x30] sm:$0xff]
    %v1285 = vld [vmem:[#allocation8 + $0x38] sm:$0xff]
    %v1286 = vld [vmem:[#allocation8 + $0x40] sm:$0xff]
    %v1287 = vld [vmem:[#allocation8 + $0x48] sm:$0xff]
    %v1288 = vld [vmem:[#allocation8 + $0x50] sm:$0xff]
    %v1289 = vld [vmem:[#allocation8 + $0x58] sm:$0xff]
    %v1290 = vld [vmem:[#allocation8 + $0x60] sm:$0xff]
    %v1291 = vld [vmem:[#allocation8 + $0x68] sm:$0xff]
    %v1292 = vld [vmem:[#allocation8 + $0x70] sm:$0xff]
    %v1293 = vld [vmem:[#allocation8 + $0x78] sm:$0xff]
    %v1294 = vld [vmem:[#allocation8 + $0x80] sm:$0xff]
    %v1295 = vld [vmem:[#allocation8 + $0x88] sm:$0xff]
    %v1296 = vld [vmem:[#allocation8 + $0x90] sm:$0xff]
    %v1297 = vld [vmem:[#allocation8 + $0x98] sm:$0xff]
    %v1298 = vld [vmem:[#allocation8 + $0xa0] sm:$0xff]
    %v1299 = vld [vmem:[#allocation8 + $0xa8] sm:$0xff]
    %v1300 = vld [vmem:[#allocation8 + $0xb0] sm:$0xff]
    %v1301 = vld [vmem:[#allocation8 + $0xb8] sm:$0xff]
    %v1302 = vld [vmem:[#allocation8 + $0xc0] sm:$0xff]
    %v1303 = vld [vmem:[#allocation8 + $0xc8] sm:$0xff]
    %v1304 = vld [vmem:[#allocation8 + $0xd0] sm:$0xff]
    %v1305 = vld [vmem:[#allocation8 + $0xd8] sm:$0xff]
    %v1306 = vld [vmem:[#allocation8 + $0xe0] sm:$0xff]
    %v1307 = vld [vmem:[#allocation8 + $0xe8] sm:$0xff]
    %v1308 = vld [vmem:[#allocation8 + $0xf0] sm:$0xff]
    %v1309 = vld [vmem:[#allocation8 + $0xf8] sm:$0xff]
    %v1310 = vld [vmem:[#allocation8 + $0x100] sm:$0xff]
    %v1311 = vld [vmem:[#allocation8 + $0x108] sm:$0xff]
    %v1312 = vld [vmem:[#allocation8 + $0x110] sm:$0xff]
    %v1313 = vld [vmem:[#allocation8 + $0x118] sm:$0xff]
    %v1314 = vld [vmem:[#allocation8 + $0x120] sm:$0xff]
    %v1315 = vld [vmem:[#allocation8 + $0x128] sm:$0xff]
    %v1316 = vld [vmem:[#allocation8 + $0x130] sm:$0xff]
    %v1317 = vld [vmem:[#allocation8 + $0x138] sm:$0xff]
    %v1318 = vld [vmem:[#allocation8 + $0x140] sm:$0xff]
    %v1319 = vld [vmem:[#allocation8 + $0x148] sm:$0xff]
    %v1320 = vld [vmem:[#allocation8 + $0x150] sm:$0xff]
    %v1321 = vld [vmem:[#allocation8 + $0x158] sm:$0xff]
    %v1322 = vld [vmem:[#allocation8 + $0x160] sm:$0xff]
    %v1323 = vld [vmem:[#allocation8 + $0x168] sm:$0xff]
    %v1324 = vld [vmem:[#allocation8 + $0x170] sm:$0xff]
    %v1325 = vld [vmem:[#allocation8 + $0x178] sm:$0xff]
    %v1326 = vld [vmem:[#allocation8 + $0x180] sm:$0xff]
    %v1327 = vld [vmem:[#allocation8 + $0x188] sm:$0xff]
    %v1328 = vld [vmem:[#allocation8 + $0x190] sm:$0xff]
    %v1329 = vld [vmem:[#allocation8 + $0x198] sm:$0xff]
    %v1330 = vld [vmem:[#allocation8 + $0x1a0] sm:$0xff]
    %v1331 = vld [vmem:[#allocation8 + $0x1a8] sm:$0xff]
    %v1332 = vld [vmem:[#allocation8 + $0x1b0] sm:$0xff]
    %v1333 = vld [vmem:[#allocation8 + $0x1b8] sm:$0xff]
    %v1334 = vld [vmem:[#allocation8 + $0x1c0] sm:$0xff]
    %v1335 = vld [vmem:[#allocation8 + $0x1c8] sm:$0xff]
    %v1336 = vld [vmem:[#allocation8 + $0x1d0] sm:$0xff]
    %v1337 = vld [vmem:[#allocation8 + $0x1d8] sm:$0xff]
    %v1338 = vld [vmem:[#allocation8 + $0x1e0] sm:$0xff]
    %v1339 = vld [vmem:[#allocation8 + $0x1e8] sm:$0xff]
    %v1340 = vld [vmem:[#allocation8 + $0x1f0] sm:$0xff]
    %v1341 = vld [vmem:[#allocation8 + $0x1f8] sm:$0xff]
    %v1342 = vld [vmem:[%s6] sm:$0x1]
    %v1344 = vlaneseq
    %v1345 = vshrl.u32 %v1344, 7
    %v1346 = vsub.s32 0, %v1345
    %v1347 = vrot.slane %v1342, %v1346
    %1349 = vmatprep.subr.mxu0 0.0
    %1350 = vmatpush1.msra.mxu0 %v1278
    %1351 = vmatprep.subr.mxu0 0.0
    %1352 = vmatpush1.msra.mxu0 %v1279
    %1353 = vmatprep.subr.mxu0 0.0
    %1354 = vmatpush1.msra.mxu0 %v1280
    %1355 = vmatprep.subr.mxu0 0.0
    %1356 = vmatpush1.msra.mxu0 %v1281
    %1357 = vmatprep.subr.mxu0 0.0
    %1358 = vmatpush1.msra.mxu0 %v1282
    %1359 = vmatprep.subr.mxu0 0.0
    %1360 = vmatpush1.msra.mxu0 %v1283
    %1361 = vmatprep.subr.mxu0 0.0
    %1362 = vmatpush1.msra.mxu0 %v1284
    %1363 = vmatprep.subr.mxu0 0.0
    %1364 = vmatpush1.msra.mxu0 %v1285
    %1365 = vmatprep.subr.mxu0 0.0
    %1366 = vmatpush1.msra.mxu0 %v1286
    %1367 = vmatprep.subr.mxu0 0.0
    %1368 = vmatpush1.msra.mxu0 %v1287
    %1369 = vmatprep.subr.mxu0 0.0
    %1370 = vmatpush1.msra.mxu0 %v1288
    %1371 = vmatprep.subr.mxu0 0.0
    %1372 = vmatpush1.msra.mxu0 %v1289
    %1373 = vmatprep.subr.mxu0 0.0
    %1374 = vmatpush1.msra.mxu0 %v1290
    %1375 = vmatprep.subr.mxu0 0.0
    %1376 = vmatpush1.msra.mxu0 %v1291
    %1377 = vmatprep.subr.mxu0 0.0
    %1378 = vmatpush1.msra.mxu0 %v1292
    %1379 = vmatprep.subr.mxu0 0.0
    %1380 = vmatpush1.msra.mxu0 %v1293
    %1381 = vmatprep.subr.mxu0 0.0
    %1382 = vmatpush1.msra.mxu0 %v1294
    %1383 = vmatprep.subr.mxu0 0.0
    %1384 = vmatpush1.msra.mxu0 %v1295
    %1385 = vmatprep.subr.mxu0 0.0
    %1386 = vmatpush1.msra.mxu0 %v1296
    %1387 = vmatprep.subr.mxu0 0.0
    %1388 = vmatpush1.msra.mxu0 %v1297
    %1389 = vmatprep.subr.mxu0 0.0
    %1390 = vmatpush1.msra.mxu0 %v1298
    %1391 = vmatprep.subr.mxu0 0.0
    %1392 = vmatpush1.msra.mxu0 %v1299
    %1393 = vmatprep.subr.mxu0 0.0
    %1394 = vmatpush1.msra.mxu0 %v1300
    %1395 = vmatprep.subr.mxu0 0.0
    %1396 = vmatpush1.msra.mxu0 %v1301
    %1397 = vmatprep.subr.mxu0 0.0
    %1398 = vmatpush1.msra.mxu0 %v1302
    %1399 = vmatprep.subr.mxu0 0.0
    %1400 = vmatpush1.msra.mxu0 %v1303
    %1401 = vmatprep.subr.mxu0 0.0
    %1402 = vmatpush1.msra.mxu0 %v1304
    %1403 = vmatprep.subr.mxu0 0.0
    %1404 = vmatpush1.msra.mxu0 %v1305
    %1405 = vmatprep.subr.mxu0 0.0
    %1406 = vmatpush1.msra.mxu0 %v1306
    %1407 = vmatprep.subr.mxu0 0.0
    %1408 = vmatpush1.msra.mxu0 %v1307
    %1409 = vmatprep.subr.mxu0 0.0
    %1410 = vmatpush1.msra.mxu0 %v1308
    %1411 = vmatprep.subr.mxu0 0.0
    %1412 = vmatpush1.msra.mxu0 %v1309
    %1413 = vmatprep.mubr.f32.mxu0 %v1275
    %1414 = vmatmul.mubr.f32.gmra.mrb[0].mxu0 %v1274
    %v1415 = vpop.f32.mrb[0].mxu0
    %v1416 = vadd.f32 %v1347, %v1415
    %v1417 = vpop.f32.mrb[0].mxu0
    %1418 = vdwg.mxu0
    %1419 = vmatprep.subr.mxu0 0.0
    %1420 = vmatpush1.msra.mxu0 %v1310
    %1421 = vmatprep.subr.mxu0 0.0
    %1422 = vmatpush1.msra.mxu0 %v1311
    %1423 = vmatprep.subr.mxu0 0.0
    %1424 = vmatpush1.msra.mxu0 %v1312
    %1425 = vmatprep.subr.mxu0 0.0
    %1426 = vmatpush1.msra.mxu0 %v1313
    %1427 = vmatprep.subr.mxu0 0.0
    %1428 = vmatpush1.msra.mxu0 %v1314
    %1429 = vmatprep.subr.mxu0 0.0
    %1430 = vmatpush1.msra.mxu0 %v1315
    %1431 = vmatprep.subr.mxu0 0.0
    %1432 = vmatpush1.msra.mxu0 %v1316
    %1433 = vmatprep.subr.mxu0 0.0
    %1434 = vmatpush1.msra.mxu0 %v1317
    %1435 = vmatprep.subr.mxu0 0.0
    %1436 = vmatpush1.msra.mxu0 %v1318
    %1437 = vmatprep.subr.mxu0 0.0
    %1438 = vmatpush1.msra.mxu0 %v1319
    %1439 = vmatprep.subr.mxu0 0.0
    %1440 = vmatpush1.msra.mxu0 %v1320
    %1441 = vmatprep.subr.mxu0 0.0
    %1442 = vmatpush1.msra.mxu0 %v1321
    %1443 = vmatprep.subr.mxu0 0.0
    %1444 = vmatpush1.msra.mxu0 %v1322
    %1445 = vmatprep.subr.mxu0 0.0
    %1446 = vmatpush1.msra.mxu0 %v1323
    %1447 = vmatprep.subr.mxu0 0.0
    %1448 = vmatpush1.msra.mxu0 %v1324
    %1449 = vmatprep.subr.mxu0 0.0
    %1450 = vmatpush1.msra.mxu0 %v1325
    %1451 = vmatprep.subr.mxu0 0.0
    %1452 = vmatpush1.msra.mxu0 %v1326
    %1453 = vmatprep.subr.mxu0 0.0
    %1454 = vmatpush1.msra.mxu0 %v1327
    %1455 = vmatprep.subr.mxu0 0.0
    %1456 = vmatpush1.msra.mxu0 %v1328
    %1457 = vmatprep.subr.mxu0 0.0
    %1458 = vmatpush1.msra.mxu0 %v1329
    %1459 = vmatprep.subr.mxu0 0.0
    %1460 = vmatpush1.msra.mxu0 %v1330
    %1461 = vmatprep.subr.mxu0 0.0
    %1462 = vmatpush1.msra.mxu0 %v1331
    %1463 = vmatprep.subr.mxu0 0.0
    %1464 = vmatpush1.msra.mxu0 %v1332
    %1465 = vmatprep.subr.mxu0 0.0
    %1466 = vmatpush1.msra.mxu0 %v1333
    %1467 = vmatprep.subr.mxu0 0.0
    %1468 = vmatpush1.msra.mxu0 %v1334
    %1469 = vmatprep.subr.mxu0 0.0
    %1470 = vmatpush1.msra.mxu0 %v1335
    %1471 = vmatprep.subr.mxu0 0.0
    %1472 = vmatpush1.msra.mxu0 %v1336
    %1473 = vmatprep.subr.mxu0 0.0
    %1474 = vmatpush1.msra.mxu0 %v1337
    %1475 = vmatprep.subr.mxu0 0.0
    %1476 = vmatpush1.msra.mxu0 %v1338
    %1477 = vmatprep.subr.mxu0 0.0
    %1478 = vmatpush1.msra.mxu0 %v1339
    %1479 = vmatprep.subr.mxu0 0.0
    %1480 = vmatpush1.msra.mxu0 %v1340
    %1481 = vmatprep.subr.mxu0 0.0
    %1482 = vmatpush1.msra.mxu0 %v1341
    %1483 = vmatprep.mubr.f32.mxu0 %v1277
    %1484 = vmatmul.mubr.f32.gmra.mrb[0].mxu0 %v1276
    %v1485 = vpop.f32.mrb[0].mxu0
    %v1486 = vadd.f32 %v1416, %v1485
    %v1487 = vpop.f32.mrb[0].mxu0
    %1488 = vdwg.mxu0
    %1489 = vst [vmem:[#allocation11] sm:$0xff] %v1486
    // Predicated region
    $region50: #{tpu_custom_call.1} parent=1 // pred_check
      _
    $region51: #{tpu_custom_call.1} parent=1 // pred_check_branch
      %1491 = sbr.rel (0) target = $region53
    $region52: #{tpu_custom_call.1} parent=1 // pred_region
      %s1493 = ssub.s32 128, 16
      %1494 = vsyncadd [#allocation5], %s1493
      %s1495 = sshll.u32 [#allocation11], 4
      %s1496 = int_to_ptr.vmem [resolvable:$true] %s1495
      %1501 = dma.vmem_to_hbm [thread:$0]  %s1496, 16, %s8, [#allocation5], 16, 16, 1
    $region53: #{tpu_custom_call.1} parent=1 // pred_fallthru
      _
    // Predicated region
    $region54: #{tpu_custom_call.1} parent=1 // pred_check
      _
    $region55: #{tpu_custom_call.1} parent=1 // pred_check_branch
      %1503 = sbr.rel (0) target = $region57
    $region56: #{tpu_custom_call.1} parent=1 // pred_region
      %1504 = dma.done [#allocation5], 128
    $region57: #{tpu_custom_call.1} parent=1 // pred_fallthru
      _
    %1505 = vsyncpa [#allocation4], 1
    %1506 = vsyncpa [#allocation7], 1
    %1507 = vsyncpa [#allocation10], 1
    %1508 = vsyncpa [#allocation5], 1

</llo_original>
